<compile_context>
chip_gen: v7x
topology: tpu7x:2x2x1
jax: 0.10.0
libtpu: 0.0.40
codegen_flags: <defaults>
</compile_context>

<pallas_src>
import jax
import jax.numpy as jnp
from jax.experimental import pallas as pl
from jax.experimental.pallas import tpu as pltpu

# ----------------------------- static model config -----------------------------
N = 2                      # batch
CIN = 3                    # input channels (NCHW input)
H = W = 16                 # spatial size
COUT = 8                   # synthetic backbone output channels
CPAD = 128                 # conv out-channels zero-padded to one lane width
KPAD = 128                 # im2col K (9*CIN = 27) zero-padded to one lane width
HP, WP = H // 2, W // 2    # pooled spatial size (8, 8)
NQ = HP * WP               # pooled pixels per image = 64
IN_FEATURES = COUT * NQ    # 512 = classifier in_features
HIDDEN = 256               # hidden_units
H2 = 1024                  # fixed by the module
NUM_CLASSES = 102          # fixed by the module
OUT_PAD = 128              # logits zero-padded to one lane width


# ----------------------------- fused forward kernel -----------------------------
def _fused_kernel(pat_ref, wc_ref, bc_ref, w1_ref, b1_ref, w2_ref, b2_ref,
                  w3_ref, b3_ref, o_ref):
    """Per image: conv(im2col matmul) -> bias -> ReLU -> 2x2 maxpool -> MLP."""
    # ---- synthetic frozen backbone: 3x3 conv as ONE lane-dense MXU matmul ----
    # pat: (256, 128) bf16, rows ordered r*64 + q (r = 2x2 window pos, q = pooled px)
    acc = jnp.dot(pat_ref[0], wc_ref[...],
                  preferred_element_type=jnp.float32)          # (256, CPAD) f32
    acc = jnp.maximum(acc + bc_ref[...], 0.0)                  # bias + ReLU (VPU)

    # ---- 2x2 max-pool, stride 2: leading-dim maxima only (no XLU reduce) ----
    a = acc.reshape(4, NQ, CPAD)                               # free reinterpretation
    pooled = jnp.maximum(jnp.maximum(a[0], a[1]),
                         jnp.maximum(a[2], a[3]))              # (NQ, CPAD) [q, c]

    # ---- classifier: Linear -> ReLU -> (Dropout = id) -> Linear -> ReLU ->
    #      (Dropout = id) -> Linear.  bf16 operands, f32 accumulation. ----
    # torch flatten order is (c, h, w) = c*64 + q; contract the 8 real channels
    # against the matching 64-row blocks of w1 (kept in torch row order), so no
    # sublane->lane flatten relayout is ever materialized.
    pt = pooled.T                                              # (CPAD, NQ) [c, q]
    h = b1_ref[...]                                            # (1, HIDDEN) f32
    for c in range(COUT):                                      # static unroll: 8 small dots
        lhs = pt[c:c + 1, :].astype(jnp.bfloat16)              # (1, 64)
        h = h + jnp.dot(lhs, w1_ref[pl.ds(c * NQ, NQ), :],
                        preferred_element_type=jnp.float32)
    h = jnp.maximum(h, 0.0)

    h = jnp.dot(h.astype(jnp.bfloat16), w2_ref[...],
                preferred_element_type=jnp.float32)
    h = jnp.maximum(h + b2_ref[...], 0.0)

    out = jnp.dot(h.astype(jnp.bfloat16), w3_ref[...],
                  preferred_element_type=jnp.float32)
    o_ref[0] = out + b3_ref[...]                               # (1, OUT_PAD) f32


def fused_forward(patches, params):
    n = patches.shape[0]
    return pl.pallas_call(
        _fused_kernel,
        out_shape=jax.ShapeDtypeStruct((n, 1, OUT_PAD), jnp.float32),
        grid=(n,),
        in_specs=[
            pl.BlockSpec((1, 4 * NQ, KPAD), lambda i: (i, 0, 0)),   # patches
            pl.BlockSpec((KPAD, CPAD), lambda i: (0, 0)),           # conv weight
            pl.BlockSpec((1, CPAD), lambda i: (0, 0)),              # conv bias
            pl.BlockSpec((IN_FEATURES, HIDDEN), lambda i: (0, 0)),  # w1
            pl.BlockSpec((1, HIDDEN), lambda i: (0, 0)),            # b1
            pl.BlockSpec((HIDDEN, H2), lambda i: (0, 0)),           # w2
            pl.BlockSpec((1, H2), lambda i: (0, 0)),                # b2
            pl.BlockSpec((H2, OUT_PAD), lambda i: (0, 0)),          # w3
            pl.BlockSpec((1, OUT_PAD), lambda i: (0, 0)),           # b3
        ],
        out_specs=pl.BlockSpec((1, 1, OUT_PAD), lambda i: (i, 0, 0)),
        compiler_params=pltpu.CompilerParams(
            dimension_semantics=("parallel",)),
    )(patches, params["wc"], params["bc"], params["w1"], params["b1"],
      params["w2"], params["b2"], params["w3"], params["b3"])


# ----------------------------- wrapper -----------------------------
def _build_patches(x_nchw):
    """Lane-dense im2col patches, rows ordered (window_pos r, pooled pixel q).

    Pure XLA layout plumbing (review item: keep the kernel matmul-only)."""
    n = x_nchw.shape[0]
    x = jnp.transpose(x_nchw, (0, 2, 3, 1))                    # (n, H, W, CIN)
    xp = jnp.pad(x, ((0, 0), (1, 1), (1, 1), (0, 0)))          # (n, H+2, W+2, CIN)
    # K ordered (kh, kw, cin), matching the conv-weight row order.
    cols = [xp[:, kh:kh + H, kw:kw + W, :]
            for kh in range(3) for kw in range(3)]
    pat = jnp.concatenate(cols, axis=-1)                       # (n, H, W, 27)
    # reorder spatial rows to r*64 + q with r = dh*2 + dw, q = hp*8 + wp
    pat = pat.reshape(n, HP, 2, WP, 2, 9 * CIN)                # (n, hp, dh, wp, dw, K)
    pat = jnp.transpose(pat, (0, 2, 4, 1, 3, 5))               # (n, dh, dw, hp, wp, K)
    pat = pat.reshape(n, 4 * NQ, 9 * CIN)
    pat = jnp.pad(pat, ((0, 0), (0, 0), (0, KPAD - 9 * CIN)))  # K 27 -> 128
    return pat.astype(jnp.bfloat16)                            # (n, 256, 128)


def flower_classifier_forward(x_nchw, params):
    n = x_nchw.shape[0]
    patches = _build_patches(x_nchw)
    logits_pad = fused_forward(patches, params)                # (n, 1, OUT_PAD)
    return logits_pad.reshape(n, OUT_PAD)[:, :NUM_CLASSES]


# ----------------------------- params -----------------------------
def init_params(key):
    ks = jax.random.split(key, 8)
    s = 0.05
    # "Torch-layout" parameters (weights stored (in, out) = Linear.weight.T).
    conv_w = jax.random.normal(ks[0], (3, 3, CIN, COUT), jnp.float32) * s
    conv_b = jax.random.normal(ks[1], (COUT,), jnp.float32) * s
    w1 = jax.random.normal(ks[2], (IN_FEATURES, HIDDEN), jnp.float32) * s
    b1 = jax.random.normal(ks[3], (HIDDEN,), jnp.float32) * s
    w2 = jax.random.normal(ks[4], (HIDDEN, H2), jnp.float32) * s
    b2 = jax.random.normal(ks[5], (H2,), jnp.float32) * s
    w3 = jax.random.normal(ks[6], (H2, NUM_CLASSES), jnp.float32) * s
    b3 = jax.random.normal(ks[7], (NUM_CLASSES,), jnp.float32) * s

    # ---- fold layout transforms into the weights at init (zero runtime cost) ----
    # conv weight in im2col matrix form (rows ordered (kh,kw,cin)), K padded
    # 27 -> 128 and out-channels padded 8 -> 128, bf16.
    wc = conv_w.reshape(9 * CIN, COUT)
    wc = jnp.pad(wc, ((0, KPAD - 9 * CIN), (0, CPAD - COUT))).astype(jnp.bfloat16)
    bc = jnp.pad(conv_b, (0, CPAD - COUT)).reshape(1, CPAD)            # f32
    # w1 stays in torch row order (c*64 + q): the kernel contracts per-channel
    # 64-row blocks directly, so no row permutation is needed.
    # logits padded 102 -> 128 (zero weight/bias columns), sliced in the wrapper.
    w3p = jnp.pad(w3, ((0, 0), (0, OUT_PAD - NUM_CLASSES))).astype(jnp.bfloat16)
    b3p = jnp.pad(b3, (0, OUT_PAD - NUM_CLASSES)).reshape(1, OUT_PAD)  # f32

    return {
        "wc": wc, "bc": bc,
        "w1": w1.astype(jnp.bfloat16), "b1": b1.reshape(1, HIDDEN),
        "w2": w2.astype(jnp.bfloat16), "b2": b2.reshape(1, H2),
        "w3": w3p, "b3": b3p,
    }


if __name__ == "__main__":
    key = jax.random.PRNGKey(0)
    k_x, k_p = jax.random.split(key)

    x = jax.random.normal(k_x, (N, CIN, H, W), jnp.float32)
    params = init_params(k_p)

    fwd = jax.jit(flower_classifier_forward)
    logits = fwd(x, params)
    jax.block_until_ready(logits)

    assert logits.shape == (N, NUM_CLASSES), logits.shape
    assert logits.dtype == jnp.float32
    print("KERNEL_OK")
</pallas_src>

<mosaic_0001>
module attributes {stable_mosaic.version = 11 : i64} {
  func.func @_fused_kernel(%arg0: i32, %arg1: memref<1x256x128xbf16, #tpu.memory_space<vmem>>, %arg2: memref<128x128xbf16, #tpu.memory_space<vmem>>, %arg3: memref<1x128xf32, #tpu.memory_space<vmem>>, %arg4: memref<512x256xbf16, #tpu.memory_space<vmem>>, %arg5: memref<1x256xf32, #tpu.memory_space<vmem>>, %arg6: memref<256x1024xbf16, #tpu.memory_space<vmem>>, %arg7: memref<1x1024xf32, #tpu.memory_space<vmem>>, %arg8: memref<1024x128xbf16, #tpu.memory_space<vmem>>, %arg9: memref<1x128xf32, #tpu.memory_space<vmem>>, %arg10: memref<1x1x128xf32, #tpu.memory_space<vmem>>) attributes {dimension_semantics = [#tpu.dimension_semantics<parallel>], iteration_bounds = array<i64: 2>, scalar_prefetch = 0 : i64, scratch_operands = 0 : i64, tpu.core_type = #tpu.core_type<tc>, window_params = [{transform_indices = @transform_0, window_bounds = array<i64: 1, 256, 128>}, {pipeline_mode = #tpu.pipeline_mode<synchronous>, transform_indices = @transform_1, window_bounds = array<i64: 128, 128>}, {pipeline_mode = #tpu.pipeline_mode<synchronous>, transform_indices = @transform_2, window_bounds = array<i64: 1, 128>}, {pipeline_mode = #tpu.pipeline_mode<synchronous>, transform_indices = @transform_3, window_bounds = array<i64: 512, 256>}, {pipeline_mode = #tpu.pipeline_mode<synchronous>, transform_indices = @transform_4, window_bounds = array<i64: 1, 256>}, {pipeline_mode = #tpu.pipeline_mode<synchronous>, transform_indices = @transform_5, window_bounds = array<i64: 256, 1024>}, {pipeline_mode = #tpu.pipeline_mode<synchronous>, transform_indices = @transform_6, window_bounds = array<i64: 1, 1024>}, {pipeline_mode = #tpu.pipeline_mode<synchronous>, transform_indices = @transform_7, window_bounds = array<i64: 1024, 128>}, {pipeline_mode = #tpu.pipeline_mode<synchronous>, transform_indices = @transform_8, window_bounds = array<i64: 1, 128>}, {transform_indices = @transform_9, window_bounds = array<i64: 1, 1, 128>}]} {
    %c0 = arith.constant 0 : index
    %c0_0 = arith.constant 0 : index
    %c0_1 = arith.constant 0 : index
    %0 = vector.load %arg1[%c0, %c0_0, %c0_1] : memref<1x256x128xbf16, #tpu.memory_space<vmem>>, vector<1x256x128xbf16>
    %1 = vector.shape_cast %0 : vector<1x256x128xbf16> to vector<256x128xbf16>
    %c0_2 = arith.constant 0 : index
    %c0_3 = arith.constant 0 : index
    %2 = vector.load %arg2[%c0_2, %c0_3] : memref<128x128xbf16, #tpu.memory_space<vmem>>, vector<128x128xbf16>
    %cst = arith.constant dense<0.000000e+00> : vector<256x128xf32>
    %3 = tpu.matmul %1, %2, %cst {dimension_numbers = #tpu.dot_dimension_numbers<[1], [0], [0], [1], [0, 0, 1, 1], [], []>} : vector<256x128xbf16>, vector<128x128xbf16>, vector<256x128xf32> -> vector<256x128xf32>
    %c0_4 = arith.constant 0 : index
    %c0_5 = arith.constant 0 : index
    %4 = vector.load %arg3[%c0_4, %c0_5] : memref<1x128xf32, #tpu.memory_space<vmem>>, vector<1x128xf32>
    %5 = vector.broadcast %4 : vector<1x128xf32> to vector<256x128xf32>
    %6 = arith.addf %3, %5 : vector<256x128xf32>
    %cst_6 = arith.constant 0.000000e+00 : f32
    %7 = vector.broadcast %cst_6 : f32 to vector<256x128xf32>
    %8 = arith.maximumf %6, %7 : vector<256x128xf32>
    %9 = vector.shape_cast %8 : vector<256x128xf32> to vector<4x64x128xf32>
    %10 = vector.extract_strided_slice %9 {offsets = [0, 0, 0], sizes = [1, 64, 128], strides = [1, 1, 1]} : vector<4x64x128xf32> to vector<1x64x128xf32>
    %11 = vector.shape_cast %10 : vector<1x64x128xf32> to vector<64x128xf32>
    %12 = vector.extract_strided_slice %9 {offsets = [1, 0, 0], sizes = [1, 64, 128], strides = [1, 1, 1]} : vector<4x64x128xf32> to vector<1x64x128xf32>
    %13 = vector.shape_cast %12 : vector<1x64x128xf32> to vector<64x128xf32>
    %14 = arith.maximumf %11, %13 : vector<64x128xf32>
    %15 = vector.extract_strided_slice %9 {offsets = [2, 0, 0], sizes = [1, 64, 128], strides = [1, 1, 1]} : vector<4x64x128xf32> to vector<1x64x128xf32>
    %16 = vector.shape_cast %15 : vector<1x64x128xf32> to vector<64x128xf32>
    %17 = vector.extract_strided_slice %9 {offsets = [3, 0, 0], sizes = [1, 64, 128], strides = [1, 1, 1]} : vector<4x64x128xf32> to vector<1x64x128xf32>
    %18 = vector.shape_cast %17 : vector<1x64x128xf32> to vector<64x128xf32>
    %19 = arith.maximumf %16, %18 : vector<64x128xf32>
    %20 = arith.maximumf %14, %19 : vector<64x128xf32>
    %21 = tpu.transpose %20, [1, 0] : vector<64x128xf32> -> vector<128x64xf32>
    %c0_7 = arith.constant 0 : index
    %c0_8 = arith.constant 0 : index
    %22 = vector.load %arg5[%c0_7, %c0_8] : memref<1x256xf32, #tpu.memory_space<vmem>>, vector<1x256xf32>
    %23 = vector.extract_strided_slice %21 {offsets = [0, 0], sizes = [1, 64], strides = [1, 1]} : vector<128x64xf32> to vector<1x64xf32>
    %24 = arith.truncf %23 : vector<1x64xf32> to vector<1x64xbf16>
    %c0_9 = arith.constant 0 : index
    %c0_10 = arith.constant 0 : index
    %25 = vector.load %arg4[%c0_9, %c0_10] : memref<512x256xbf16, #tpu.memory_space<vmem>>, vector<64x256xbf16>
    %cst_11 = arith.constant dense<0.000000e+00> : vector<1x256xf32>
    %26 = tpu.matmul %24, %25, %cst_11 {dimension_numbers = #tpu.dot_dimension_numbers<[1], [0], [0], [1], [0, 0, 1, 1], [], []>} : vector<1x64xbf16>, vector<64x256xbf16>, vector<1x256xf32> -> vector<1x256xf32>
    %27 = arith.addf %22, %26 : vector<1x256xf32>
    %28 = vector.extract_strided_slice %21 {offsets = [1, 0], sizes = [1, 64], strides = [1, 1]} : vector<128x64xf32> to vector<1x64xf32>
    %29 = arith.truncf %28 : vector<1x64xf32> to vector<1x64xbf16>
    %c64 = arith.constant 64 : index
    %c0_12 = arith.constant 0 : index
    %30 = vector.load %arg4[%c64, %c0_12] : memref<512x256xbf16, #tpu.memory_space<vmem>>, vector<64x256xbf16>
    %cst_13 = arith.constant dense<0.000000e+00> : vector<1x256xf32>
    %31 = tpu.matmul %29, %30, %cst_13 {dimension_numbers = #tpu.dot_dimension_numbers<[1], [0], [0], [1], [0, 0, 1, 1], [], []>} : vector<1x64xbf16>, vector<64x256xbf16>, vector<1x256xf32> -> vector<1x256xf32>
    %32 = arith.addf %27, %31 : vector<1x256xf32>
    %33 = vector.extract_strided_slice %21 {offsets = [2, 0], sizes = [1, 64], strides = [1, 1]} : vector<128x64xf32> to vector<1x64xf32>
    %34 = arith.truncf %33 : vector<1x64xf32> to vector<1x64xbf16>
    %c128 = arith.constant 128 : index
    %c0_14 = arith.constant 0 : index
    %35 = vector.load %arg4[%c128, %c0_14] : memref<512x256xbf16, #tpu.memory_space<vmem>>, vector<64x256xbf16>
    %cst_15 = arith.constant dense<0.000000e+00> : vector<1x256xf32>
    %36 = tpu.matmul %34, %35, %cst_15 {dimension_numbers = #tpu.dot_dimension_numbers<[1], [0], [0], [1], [0, 0, 1, 1], [], []>} : vector<1x64xbf16>, vector<64x256xbf16>, vector<1x256xf32> -> vector<1x256xf32>
    %37 = arith.addf %32, %36 : vector<1x256xf32>
    %38 = vector.extract_strided_slice %21 {offsets = [3, 0], sizes = [1, 64], strides = [1, 1]} : vector<128x64xf32> to vector<1x64xf32>
    %39 = arith.truncf %38 : vector<1x64xf32> to vector<1x64xbf16>
    %c192 = arith.constant 192 : index
    %c0_16 = arith.constant 0 : index
    %40 = vector.load %arg4[%c192, %c0_16] : memref<512x256xbf16, #tpu.memory_space<vmem>>, vector<64x256xbf16>
    %cst_17 = arith.constant dense<0.000000e+00> : vector<1x256xf32>
    %41 = tpu.matmul %39, %40, %cst_17 {dimension_numbers = #tpu.dot_dimension_numbers<[1], [0], [0], [1], [0, 0, 1, 1], [], []>} : vector<1x64xbf16>, vector<64x256xbf16>, vector<1x256xf32> -> vector<1x256xf32>
    %42 = arith.addf %37, %41 : vector<1x256xf32>
    %43 = vector.extract_strided_slice %21 {offsets = [4, 0], sizes = [1, 64], strides = [1, 1]} : vector<128x64xf32> to vector<1x64xf32>
    %44 = arith.truncf %43 : vector<1x64xf32> to vector<1x64xbf16>
    %c256 = arith.constant 256 : index
    %c0_18 = arith.constant 0 : index
    %45 = vector.load %arg4[%c256, %c0_18] : memref<512x256xbf16, #tpu.memory_space<vmem>>, vector<64x256xbf16>
    %cst_19 = arith.constant dense<0.000000e+00> : vector<1x256xf32>
    %46 = tpu.matmul %44, %45, %cst_19 {dimension_numbers = #tpu.dot_dimension_numbers<[1], [0], [0], [1], [0, 0, 1, 1], [], []>} : vector<1x64xbf16>, vector<64x256xbf16>, vector<1x256xf32> -> vector<1x256xf32>
    %47 = arith.addf %42, %46 : vector<1x256xf32>
    %48 = vector.extract_strided_slice %21 {offsets = [5, 0], sizes = [1, 64], strides = [1, 1]} : vector<128x64xf32> to vector<1x64xf32>
    %49 = arith.truncf %48 : vector<1x64xf32> to vector<1x64xbf16>
    %c320 = arith.constant 320 : index
    %c0_20 = arith.constant 0 : index
    %50 = vector.load %arg4[%c320, %c0_20] : memref<512x256xbf16, #tpu.memory_space<vmem>>, vector<64x256xbf16>
    %cst_21 = arith.constant dense<0.000000e+00> : vector<1x256xf32>
    %51 = tpu.matmul %49, %50, %cst_21 {dimension_numbers = #tpu.dot_dimension_numbers<[1], [0], [0], [1], [0, 0, 1, 1], [], []>} : vector<1x64xbf16>, vector<64x256xbf16>, vector<1x256xf32> -> vector<1x256xf32>
    %52 = arith.addf %47, %51 : vector<1x256xf32>
    %53 = vector.extract_strided_slice %21 {offsets = [6, 0], sizes = [1, 64], strides = [1, 1]} : vector<128x64xf32> to vector<1x64xf32>
    %54 = arith.truncf %53 : vector<1x64xf32> to vector<1x64xbf16>
    %c384 = arith.constant 384 : index
    %c0_22 = arith.constant 0 : index
    %55 = vector.load %arg4[%c384, %c0_22] : memref<512x256xbf16, #tpu.memory_space<vmem>>, vector<64x256xbf16>
    %cst_23 = arith.constant dense<0.000000e+00> : vector<1x256xf32>
    %56 = tpu.matmul %54, %55, %cst_23 {dimension_numbers = #tpu.dot_dimension_numbers<[1], [0], [0], [1], [0, 0, 1, 1], [], []>} : vector<1x64xbf16>, vector<64x256xbf16>, vector<1x256xf32> -> vector<1x256xf32>
    %57 = arith.addf %52, %56 : vector<1x256xf32>
    %58 = vector.extract_strided_slice %21 {offsets = [7, 0], sizes = [1, 64], strides = [1, 1]} : vector<128x64xf32> to vector<1x64xf32>
    %59 = arith.truncf %58 : vector<1x64xf32> to vector<1x64xbf16>
    %c448 = arith.constant 448 : index
    %c0_24 = arith.constant 0 : index
    %60 = vector.load %arg4[%c448, %c0_24] : memref<512x256xbf16, #tpu.memory_space<vmem>>, vector<64x256xbf16>
    %cst_25 = arith.constant dense<0.000000e+00> : vector<1x256xf32>
    %61 = tpu.matmul %59, %60, %cst_25 {dimension_numbers = #tpu.dot_dimension_numbers<[1], [0], [0], [1], [0, 0, 1, 1], [], []>} : vector<1x64xbf16>, vector<64x256xbf16>, vector<1x256xf32> -> vector<1x256xf32>
    %62 = arith.addf %57, %61 : vector<1x256xf32>
    %cst_26 = arith.constant 0.000000e+00 : f32
    %63 = vector.broadcast %cst_26 : f32 to vector<1x256xf32>
    %64 = arith.maximumf %62, %63 : vector<1x256xf32>
    %65 = arith.truncf %64 : vector<1x256xf32> to vector<1x256xbf16>
    %c0_27 = arith.constant 0 : index
    %c0_28 = arith.constant 0 : index
    %66 = vector.load %arg6[%c0_27, %c0_28] : memref<256x1024xbf16, #tpu.memory_space<vmem>>, vector<256x1024xbf16>
    %cst_29 = arith.constant dense<0.000000e+00> : vector<1x1024xf32>
    %67 = tpu.matmul %65, %66, %cst_29 {dimension_numbers = #tpu.dot_dimension_numbers<[1], [0], [0], [1], [0, 0, 1, 1], [], []>} : vector<1x256xbf16>, vector<256x1024xbf16>, vector<1x1024xf32> -> vector<1x1024xf32>
    %c0_30 = arith.constant 0 : index
    %c0_31 = arith.constant 0 : index
    %68 = vector.load %arg7[%c0_30, %c0_31] : memref<1x1024xf32, #tpu.memory_space<vmem>>, vector<1x1024xf32>
    %69 = arith.addf %67, %68 : vector<1x1024xf32>
    %cst_32 = arith.constant 0.000000e+00 : f32
    %70 = vector.broadcast %cst_32 : f32 to vector<1x1024xf32>
    %71 = arith.maximumf %69, %70 : vector<1x1024xf32>
    %72 = arith.truncf %71 : vector<1x1024xf32> to vector<1x1024xbf16>
    %c0_33 = arith.constant 0 : index
    %c0_34 = arith.constant 0 : index
    %73 = vector.load %arg8[%c0_33, %c0_34] : memref<1024x128xbf16, #tpu.memory_space<vmem>>, vector<1024x128xbf16>
    %cst_35 = arith.constant dense<0.000000e+00> : vector<1x128xf32>
    %74 = tpu.matmul %72, %73, %cst_35 {dimension_numbers = #tpu.dot_dimension_numbers<[1], [0], [0], [1], [0, 0, 1, 1], [], []>} : vector<1x1024xbf16>, vector<1024x128xbf16>, vector<1x128xf32> -> vector<1x128xf32>
    %c0_36 = arith.constant 0 : index
    %c0_37 = arith.constant 0 : index
    %75 = vector.load %arg9[%c0_36, %c0_37] : memref<1x128xf32, #tpu.memory_space<vmem>>, vector<1x128xf32>
    %76 = arith.addf %74, %75 : vector<1x128xf32>
    %c0_38 = arith.constant 0 : index
    %c0_39 = arith.constant 0 : index
    %c0_40 = arith.constant 0 : index
    %77 = vector.load %arg10[%c0_38, %c0_39, %c0_40] : memref<1x1x128xf32, #tpu.memory_space<vmem>>, vector<1x1x128xf32>
    %78 = vector.shape_cast %77 : vector<1x1x128xf32> to vector<1x128xf32>
    %79 = vector.shape_cast %76 : vector<1x128xf32> to vector<1x1x128xf32>
    tpu.vector_store %arg10[%c0_38, %c0_39, %c0_40], %79 {strides = array<i32>} : memref<1x1x128xf32, #tpu.memory_space<vmem>>, vector<1x1x128xf32>,
    return
  }
  func.func @transform_0(%arg0: i32) -> (i32, i32, i32) {
    %c0_i32 = arith.constant 0 : i32
    %c0_i32_0 = arith.constant 0 : i32
    %c0_i32_1 = arith.constant 0 : i32
    return %arg0, %c0_i32, %c0_i32_0 : i32, i32, i32
  }
  func.func @transform_1(%arg0: i32) -> (i32, i32) {
    %c0_i32 = arith.constant 0 : i32
    %c0_i32_0 = arith.constant 0 : i32
    %c0_i32_1 = arith.constant 0 : i32
    return %c0_i32, %c0_i32_0 : i32, i32
  }
  func.func @transform_2(%arg0: i32) -> (i32, i32) {
    %c0_i32 = arith.constant 0 : i32
    %c0_i32_0 = arith.constant 0 : i32
    %c0_i32_1 = arith.constant 0 : i32
    return %c0_i32, %c0_i32_0 : i32, i32
  }
  func.func @transform_3(%arg0: i32) -> (i32, i32) {
    %c0_i32 = arith.constant 0 : i32
    %c0_i32_0 = arith.constant 0 : i32
    %c0_i32_1 = arith.constant 0 : i32
    return %c0_i32, %c0_i32_0 : i32, i32
  }
  func.func @transform_4(%arg0: i32) -> (i32, i32) {
    %c0_i32 = arith.constant 0 : i32
    %c0_i32_0 = arith.constant 0 : i32
    %c0_i32_1 = arith.constant 0 : i32
    return %c0_i32, %c0_i32_0 : i32, i32
  }
  func.func @transform_5(%arg0: i32) -> (i32, i32) {
    %c0_i32 = arith.constant 0 : i32
    %c0_i32_0 = arith.constant 0 : i32
    %c0_i32_1 = arith.constant 0 : i32
    return %c0_i32, %c0_i32_0 : i32, i32
  }
  func.func @transform_6(%arg0: i32) -> (i32, i32) {
    %c0_i32 = arith.constant 0 : i32
    %c0_i32_0 = arith.constant 0 : i32
    %c0_i32_1 = arith.constant 0 : i32
    return %c0_i32, %c0_i32_0 : i32, i32
  }
  func.func @transform_7(%arg0: i32) -> (i32, i32) {
    %c0_i32 = arith.constant 0 : i32
    %c0_i32_0 = arith.constant 0 : i32
    %c0_i32_1 = arith.constant 0 : i32
    return %c0_i32, %c0_i32_0 : i32, i32
  }
  func.func @transform_8(%arg0: i32) -> (i32, i32) {
    %c0_i32 = arith.constant 0 : i32
    %c0_i32_0 = arith.constant 0 : i32
    %c0_i32_1 = arith.constant 0 : i32
    return %c0_i32, %c0_i32_0 : i32, i32
  }
  func.func @transform_9(%arg0: i32) -> (i32, i32, i32) {
    %c0_i32 = arith.constant 0 : i32
    %c0_i32_0 = arith.constant 0 : i32
    %c0_i32_1 = arith.constant 0 : i32
    return %arg0, %c0_i32, %c0_i32_0 : i32, i32, i32
  }
}

</mosaic_0001>

<llo_original>
// kernel: flower_classifier_forward.1
$region0: #{flower_classifier_forward.1}
  #allocation0 [shape = 'u32[]', space=smem, size = 0x4, offset = 0x4, fixed_abs, tag = 'smem constant byte address 0x4 - core index']
  #allocation1 [shape = 'u32[144,128]{1,0:T(1,128)}', space=vmem, size = 0x12000, scoped, tag = 'internal scratch']
  %s0 = inlined_call_operand.vmem [shape: bf16[2,256,128], index: 0, kind: input, shape index: {}]
  %s1 = inlined_call_operand.vmem [shape: bf16[128,128], index: 1, kind: input, shape index: {}]
  %s2 = inlined_call_operand.vmem [shape: f32[1,128], index: 2, kind: input, shape index: {}]
  %s3 = inlined_call_operand.vmem [shape: bf16[512,256], index: 3, kind: input, shape index: {}]
  %s4 = inlined_call_operand.vmem [shape: f32[1,256], index: 4, kind: input, shape index: {}]
  %s5 = inlined_call_operand.vmem [shape: bf16[256,1024], index: 5, kind: input, shape index: {}]
  %s6 = inlined_call_operand.vmem [shape: f32[1,1024], index: 6, kind: input, shape index: {}]
  %s7 = inlined_call_operand.vmem [shape: bf16[1024,128], index: 7, kind: input, shape index: {}]
  %s8 = inlined_call_operand.vmem [shape: f32[1,128], index: 8, kind: input, shape index: {}]
  %s9 = inlined_call_operand.hbm [shape: f32[2,1,128], index: 9, kind: output, shape index: {}]
  %s10 = sld [smem:[#allocation0]]
  $region69: #{flower_classifier_forward.1} parent=0
    _
  %s12 = ssub.s32 1, %s10
  %s13 = scalar_select 0, %s12, %s10
  $region1: #{flower_classifier_forward.1} parent=0
    #allocation2 [shape = 'u8[1024]{0}', space=vmem, size = 0x400, scoped, tag = 'output window, operand 0']
    #allocation3 [shape = 's32[2]{0}', space=sflag, size = 0x8, scoped, tag = 'scoped memory for flower_classifier_forward.1']
    %14 = vsyncpa [#allocation3], 0
    %s15 = scalar_lea.sflag [#allocation3], 1
    %16 = vsyncpa %s15, 0
    loop: start=0, step=1, limit=4
    $region2: #{flower_classifier_forward.1} parent=1 // loop_pre_header
      _
    $region3: #{flower_classifier_forward.1} parent=1 // loop_header
      %s18 = sphi 0, %s22
      %p19 = scmp.ge.s32.totalorder %s18, 4
      %s28 = sphi 0, %s30
      %s31 = sphi 0, %s28
      %s32 = sphi 0, %s31
      %s48 = sphi 0, %s32
      %s52 = sphi 0, %s52
      %s54 = sphi 0, %s52
      %s55 = sphi 0, %s54
      %s69 = sphi 0, %s55
      %s73 = sphi 0, %s73
      %s75 = sphi 0, %s73
      %s76 = sphi 0, %s75
      %s90 = sphi 0, %s76
      %s94 = sphi 0, %s94
      %s96 = sphi 0, %s94
      %s97 = sphi 0, %s96
      %s111 = sphi 0, %s97
      %s115 = sphi 0, %s115
      %s117 = sphi 0, %s115
      %s118 = sphi 0, %s117
      %s132 = sphi 0, %s118
      %s136 = sphi 0, %s136
      %s138 = sphi 0, %s136
      %s139 = sphi 0, %s138
      %s153 = sphi 0, %s139
      %s157 = sphi 0, %s157
      %s159 = sphi 0, %s157
      %s160 = sphi 0, %s159
      %s174 = sphi 0, %s160
      %s178 = sphi 0, %s178
      %s180 = sphi 0, %s178
      %s181 = sphi 0, %s180
      %s195 = sphi 0, %s181
      %s199 = sphi 0, %s199
      %s201 = sphi 0, %s199
      %s202 = sphi 0, %s201
      %s216 = sphi 0, %s202
      %s222 = sphi 0, %s224
      %s225 = sphi 0, %s222
      %s226 = sphi 0, %s225
      %s242 = sphi 0, %s226
    $region4: #{flower_classifier_forward.1} parent=1 // loop_header_branch
      %21 = sbr.rel (%p19) target = $region8
    $region5: #{flower_classifier_forward.1} parent=1 // loop_body
      %s23 = ssub.s32 %s18, 1
      %s24 = ssub.s32 %s18, 2
      %s25 = sadd.s32 %s18, 1
      %s26 = ssub.s32 %s18, %s25
      %p27 = scmp.eq.s32.totalorder %s26, 0
      %s29 = sadd.s32 %s28, 1
      %s30 = scalar_select %p27, %s28, %s29
      %p33 = pneg %p27
      %p34 = scmp.eq.s32.totalorder %s18, 1
      %p35 = por %p33, %p34
      %p36 = scmp.ne.s32.totalorder %s28, %s31
      %p37 = scmp.eq.s32.totalorder %s18, 0
      %p38 = por %p36, %p37
      %p39 = scmp.ne.s32.totalorder %s28, %s31
      %p40 = scmp.eq.s32.totalorder %s23, 1
      %p41 = por %p39, %p40
      %p42 = scmp.ne.s32.totalorder %s31, %s32
      %p43 = scmp.eq.s32.totalorder %s23, 0
      %p44 = por %p42, %p43
      %p45 = scmp.ne.s32.totalorder %s31, %s32
      %p46 = scmp.eq.s32.totalorder %s24, 1
      %p47 = por %p45, %p46
      %p49 = scmp.ne.s32.totalorder %s32, %s48
      %p50 = scmp.eq.s32.totalorder %s24, 0
      %p51 = por %p49, %p50
      %s53 = sadd.s32 %s52, 1
      %p56 = scmp.eq.s32.totalorder %s18, 1
      %p57 = scmp.ne.s32.totalorder %s52, %s54
      %p58 = scmp.eq.s32.totalorder %s18, 0
      %p59 = por %p57, %p58
      %p60 = scmp.ne.s32.totalorder %s52, %s54
      %p61 = scmp.eq.s32.totalorder %s23, 1
      %p62 = por %p60, %p61
      %p63 = scmp.ne.s32.totalorder %s54, %s55
      %p64 = scmp.eq.s32.totalorder %s23, 0
      %p65 = por %p63, %p64
      %p66 = scmp.ne.s32.totalorder %s54, %s55
      %p67 = scmp.eq.s32.totalorder %s24, 1
      %p68 = por %p66, %p67
      %p70 = scmp.ne.s32.totalorder %s55, %s69
      %p71 = scmp.eq.s32.totalorder %s24, 0
      %p72 = por %p70, %p71
      %s74 = sadd.s32 %s73, 1
      %p77 = scmp.eq.s32.totalorder %s18, 1
      %p78 = scmp.ne.s32.totalorder %s73, %s75
      %p79 = scmp.eq.s32.totalorder %s18, 0
      %p80 = por %p78, %p79
      %p81 = scmp.ne.s32.totalorder %s73, %s75
      %p82 = scmp.eq.s32.totalorder %s23, 1
      %p83 = por %p81, %p82
      %p84 = scmp.ne.s32.totalorder %s75, %s76
      %p85 = scmp.eq.s32.totalorder %s23, 0
      %p86 = por %p84, %p85
      %p87 = scmp.ne.s32.totalorder %s75, %s76
      %p88 = scmp.eq.s32.totalorder %s24, 1
      %p89 = por %p87, %p88
      %p91 = scmp.ne.s32.totalorder %s76, %s90
      %p92 = scmp.eq.s32.totalorder %s24, 0
      %p93 = por %p91, %p92
      %s95 = sadd.s32 %s94, 1
      %p98 = scmp.eq.s32.totalorder %s18, 1
      %p99 = scmp.ne.s32.totalorder %s94, %s96
      %p100 = scmp.eq.s32.totalorder %s18, 0
      %p101 = por %p99, %p100
      %p102 = scmp.ne.s32.totalorder %s94, %s96
      %p103 = scmp.eq.s32.totalorder %s23, 1
      %p104 = por %p102, %p103
      %p105 = scmp.ne.s32.totalorder %s96, %s97
      %p106 = scmp.eq.s32.totalorder %s23, 0
      %p107 = por %p105, %p106
      %p108 = scmp.ne.s32.totalorder %s96, %s97
      %p109 = scmp.eq.s32.totalorder %s24, 1
      %p110 = por %p108, %p109
      %p112 = scmp.ne.s32.totalorder %s97, %s111
      %p113 = scmp.eq.s32.totalorder %s24, 0
      %p114 = por %p112, %p113
      %s116 = sadd.s32 %s115, 1
      %p119 = scmp.eq.s32.totalorder %s18, 1
      %p120 = scmp.ne.s32.totalorder %s115, %s117
      %p121 = scmp.eq.s32.totalorder %s18, 0
      %p122 = por %p120, %p121
      %p123 = scmp.ne.s32.totalorder %s115, %s117
      %p124 = scmp.eq.s32.totalorder %s23, 1
      %p125 = por %p123, %p124
      %p126 = scmp.ne.s32.totalorder %s117, %s118
      %p127 = scmp.eq.s32.totalorder %s23, 0
      %p128 = por %p126, %p127
      %p129 = scmp.ne.s32.totalorder %s117, %s118
      %p130 = scmp.eq.s32.totalorder %s24, 1
      %p131 = por %p129, %p130
      %p133 = scmp.ne.s32.totalorder %s118, %s132
      %p134 = scmp.eq.s32.totalorder %s24, 0
      %p135 = por %p133, %p134
      %s137 = sadd.s32 %s136, 1
      %p140 = scmp.eq.s32.totalorder %s18, 1
      %p141 = scmp.ne.s32.totalorder %s136, %s138
      %p142 = scmp.eq.s32.totalorder %s18, 0
      %p143 = por %p141, %p142
      %p144 = scmp.ne.s32.totalorder %s136, %s138
      %p145 = scmp.eq.s32.totalorder %s23, 1
      %p146 = por %p144, %p145
      %p147 = scmp.ne.s32.totalorder %s138, %s139
      %p148 = scmp.eq.s32.totalorder %s23, 0
      %p149 = por %p147, %p148
      %p150 = scmp.ne.s32.totalorder %s138, %s139
      %p151 = scmp.eq.s32.totalorder %s24, 1
      %p152 = por %p150, %p151
      %p154 = scmp.ne.s32.totalorder %s139, %s153
      %p155 = scmp.eq.s32.totalorder %s24, 0
      %p156 = por %p154, %p155
      %s158 = sadd.s32 %s157, 1
      %p161 = scmp.eq.s32.totalorder %s18, 1
      %p162 = scmp.ne.s32.totalorder %s157, %s159
      %p163 = scmp.eq.s32.totalorder %s18, 0
      %p164 = por %p162, %p163
      %p165 = scmp.ne.s32.totalorder %s157, %s159
      %p166 = scmp.eq.s32.totalorder %s23, 1
      %p167 = por %p165, %p166
      %p168 = scmp.ne.s32.totalorder %s159, %s160
      %p169 = scmp.eq.s32.totalorder %s23, 0
      %p170 = por %p168, %p169
      %p171 = scmp.ne.s32.totalorder %s159, %s160
      %p172 = scmp.eq.s32.totalorder %s24, 1
      %p173 = por %p171, %p172
      %p175 = scmp.ne.s32.totalorder %s160, %s174
      %p176 = scmp.eq.s32.totalorder %s24, 0
      %p177 = por %p175, %p176
      %s179 = sadd.s32 %s178, 1
      %p182 = scmp.eq.s32.totalorder %s18, 1
      %p183 = scmp.ne.s32.totalorder %s178, %s180
      %p184 = scmp.eq.s32.totalorder %s18, 0
      %p185 = por %p183, %p184
      %p186 = scmp.ne.s32.totalorder %s178, %s180
      %p187 = scmp.eq.s32.totalorder %s23, 1
      %p188 = por %p186, %p187
      %p189 = scmp.ne.s32.totalorder %s180, %s181
      %p190 = scmp.eq.s32.totalorder %s23, 0
      %p191 = por %p189, %p190
      %p192 = scmp.ne.s32.totalorder %s180, %s181
      %p193 = scmp.eq.s32.totalorder %s24, 1
      %p194 = por %p192, %p193
      %p196 = scmp.ne.s32.totalorder %s181, %s195
      %p197 = scmp.eq.s32.totalorder %s24, 0
      %p198 = por %p196, %p197
      %s200 = sadd.s32 %s199, 1
      %p203 = scmp.eq.s32.totalorder %s18, 1
      %p204 = scmp.ne.s32.totalorder %s199, %s201
      %p205 = scmp.eq.s32.totalorder %s18, 0
      %p206 = por %p204, %p205
      %p207 = scmp.ne.s32.totalorder %s199, %s201
      %p208 = scmp.eq.s32.totalorder %s23, 1
      %p209 = por %p207, %p208
      %p210 = scmp.ne.s32.totalorder %s201, %s202
      %p211 = scmp.eq.s32.totalorder %s23, 0
      %p212 = por %p210, %p211
      %p213 = scmp.ne.s32.totalorder %s201, %s202
      %p214 = scmp.eq.s32.totalorder %s24, 1
      %p215 = por %p213, %p214
      %p217 = scmp.ne.s32.totalorder %s202, %s216
      %p218 = scmp.eq.s32.totalorder %s24, 0
      %p219 = por %p217, %p218
      %s220 = ssub.s32 %s18, %s25
      %p221 = scmp.eq.s32.totalorder %s220, 0
      %s223 = sadd.s32 %s222, 1
      %s224 = scalar_select %p221, %s222, %s223
      %p227 = pneg %p221
      %p228 = scmp.eq.s32.totalorder %s18, 1
      %p229 = por %p227, %p228
      %p230 = scmp.ne.s32.totalorder %s222, %s225
      %p231 = scmp.eq.s32.totalorder %s18, 0
      %p232 = por %p230, %p231
      %p233 = scmp.ne.s32.totalorder %s222, %s225
      %p234 = scmp.eq.s32.totalorder %s23, 1
      %p235 = por %p233, %p234
      %p236 = scmp.ne.s32.totalorder %s225, %s226
      %p237 = scmp.eq.s32.totalorder %s23, 0
      %p238 = por %p236, %p237
      %p239 = scmp.ne.s32.totalorder %s225, %s226
      %p240 = scmp.eq.s32.totalorder %s24, 1
      %p241 = por %p239, %p240
      %p243 = scmp.ne.s32.totalorder %s226, %s242
      %p244 = scmp.eq.s32.totalorder %s24, 0
      %p245 = por %p243, %p244
      %p246 = scmp.le.s32.totalorder 1, %s18
      %p247 = scmp.lt.s32.totalorder %s18, 3
      %p248 = pnand %p246, %p247
      %p249 = pneg %p248
      // Predicated region
      $region9: #{flower_classifier_forward.1} parent=5 // pred_check
        _
      $region10: #{flower_classifier_forward.1} parent=5 // pred_check_branch
        %251 = sbr.rel (%p248) target = $region12
      $region11: #{flower_classifier_forward.1} parent=5 // pred_region
        %s252 = ssub.s32 %s18, 1
        // Predicated region
        $region13: #{flower_classifier_forward.1} parent=11 // pred_check
          %p253 = pneg %p65
        $region14: #{flower_classifier_forward.1} parent=11 // pred_check_branch
          %255 = sbr.rel (%p253) target = $region16
        $region15: #{flower_classifier_forward.1} parent=11 // pred_region
          _
        $region16: #{flower_classifier_forward.1} parent=11 // pred_fallthru
          _
        // Predicated region
        $region17: #{flower_classifier_forward.1} parent=11 // pred_check
          %p256 = pneg %p86
        $region18: #{flower_classifier_forward.1} parent=11 // pred_check_branch
          %258 = sbr.rel (%p256) target = $region20
        $region19: #{flower_classifier_forward.1} parent=11 // pred_region
          _
        $region20: #{flower_classifier_forward.1} parent=11 // pred_fallthru
          _
        // Predicated region
        $region21: #{flower_classifier_forward.1} parent=11 // pred_check
          %p259 = pneg %p107
        $region22: #{flower_classifier_forward.1} parent=11 // pred_check_branch
          %261 = sbr.rel (%p259) target = $region24
        $region23: #{flower_classifier_forward.1} parent=11 // pred_region
          _
        $region24: #{flower_classifier_forward.1} parent=11 // pred_fallthru
          _
        // Predicated region
        $region25: #{flower_classifier_forward.1} parent=11 // pred_check
          %p262 = pneg %p128
        $region26: #{flower_classifier_forward.1} parent=11 // pred_check_branch
          %264 = sbr.rel (%p262) target = $region28
        $region27: #{flower_classifier_forward.1} parent=11 // pred_region
          _
        $region28: #{flower_classifier_forward.1} parent=11 // pred_fallthru
          _
        // Predicated region
        $region29: #{flower_classifier_forward.1} parent=11 // pred_check
          %p265 = pneg %p149
        $region30: #{flower_classifier_forward.1} parent=11 // pred_check_branch
          %267 = sbr.rel (%p265) target = $region32
        $region31: #{flower_classifier_forward.1} parent=11 // pred_region
          _
        $region32: #{flower_classifier_forward.1} parent=11 // pred_fallthru
          _
        // Predicated region
        $region33: #{flower_classifier_forward.1} parent=11 // pred_check
          %p268 = pneg %p170
        $region34: #{flower_classifier_forward.1} parent=11 // pred_check_branch
          %270 = sbr.rel (%p268) target = $region36
        $region35: #{flower_classifier_forward.1} parent=11 // pred_region
          _
        $region36: #{flower_classifier_forward.1} parent=11 // pred_fallthru
          _
        // Predicated region
        $region37: #{flower_classifier_forward.1} parent=11 // pred_check
          %p271 = pneg %p191
        $region38: #{flower_classifier_forward.1} parent=11 // pred_check_branch
          %273 = sbr.rel (%p271) target = $region40
        $region39: #{flower_classifier_forward.1} parent=11 // pred_region
          _
        $region40: #{flower_classifier_forward.1} parent=11 // pred_fallthru
          _
        // Predicated region
        $region41: #{flower_classifier_forward.1} parent=11 // pred_check
          %p274 = pneg %p212
        $region42: #{flower_classifier_forward.1} parent=11 // pred_check_branch
          %276 = sbr.rel (%p274) target = $region44
        $region43: #{flower_classifier_forward.1} parent=11 // pred_region
          _
        $region44: #{flower_classifier_forward.1} parent=11 // pred_fallthru
          _
      $region12: #{flower_classifier_forward.1} parent=5 // pred_fallthru
        _
      %p277 = scmp.lt.s32.totalorder %s18, 2
      // Predicated region
      $region45: #{flower_classifier_forward.1} parent=5 // pred_check
        %p278 = pneg %p277
      $region46: #{flower_classifier_forward.1} parent=5 // pred_check_branch
        %280 = sbr.rel (%p278) target = $region48
      $region47: #{flower_classifier_forward.1} parent=5 // pred_region
        // Predicated region
        $region49: #{flower_classifier_forward.1} parent=47 // pred_check
          %p281 = pneg %p38
        $region50: #{flower_classifier_forward.1} parent=47 // pred_check_branch
          %283 = sbr.rel (%p281) target = $region52
        $region51: #{flower_classifier_forward.1} parent=47 // pred_region
          %p284 = scmp.lt.s32.totalorder %s18, 1
          %s285 = scalar_select %p284, %s18, 1
          %s286 = smul.addr %s285, 32
          %s287 = smul.addr %s286, 4
          %s288 = scalar_lea.vmem %s0, %s287
        $region52: #{flower_classifier_forward.1} parent=47 // pred_fallthru
          _
      $region48: #{flower_classifier_forward.1} parent=5 // pred_fallthru
        _
      %p289 = scmp.le.s32.totalorder 1, %s18
      %p290 = scmp.lt.s32.totalorder %s18, 3
      %p291 = pnand %p289, %p290
      %p292 = pneg %p291
      // Predicated region
      $region53: #{flower_classifier_forward.1} parent=5 // pred_check
        _
      $region54: #{flower_classifier_forward.1} parent=5 // pred_check_branch
        %294 = sbr.rel (%p291) target = $region56
      $region55: #{flower_classifier_forward.1} parent=5 // pred_region
        %s295 = ssub.s32 %s18, 1
        %p296 = scmp.lt.s32.totalorder %s23, 1
        %s297 = scalar_select %p296, %s23, 1
        %s298 = smul.addr %s297, 32
        %s299 = smul.addr %s298, 4
        %s300 = scalar_lea.vmem %s0, %s299
        %p301 = pneg %p44
        %p302 = pneg %p41
        %p303 = pneg %p65
        %p304 = pneg %p62
        %p305 = pneg %p86
        %p306 = pneg %p83
        %p307 = pneg %p107
        %p308 = pneg %p104
        %p309 = pneg %p128
        %p310 = pneg %p125
        %p311 = pneg %p149
        %p312 = pneg %p146
        %p313 = pneg %p170
        %p314 = pneg %p167
        %p315 = pneg %p191
        %p316 = pneg %p188
        %p317 = pneg %p212
        %p318 = pneg %p209
        %p319 = pneg %p238
        %p320 = pneg %p235
        %s321 = sand.u32 %s225, 1
        %s322 = scalar_lea.sflag [#allocation3], %s321
        %s323 = sand.u32 %s225, 1
        %s324 = scalar_lea.vmem [#allocation2], %s323
        %p325 = scmp.lt.s32.totalorder %s23, 1
        %s326 = scalar_select %p325, %s23, 1
        %s327 = smul.addr %s326, 32
        %s328 = smul.addr %s327, 4
        %s329 = scalar_lea.vmem %s0, %s328
        %v331 = vld [vmem:[%s329] sm:$0xf]
        %v332 = vld [vmem:[%s329 + $0x4] sm:$0xf]
        %v333 = vld [vmem:[%s329 + $0x8] sm:$0xf]
        %v334 = vld [vmem:[%s329 + $0xc] sm:$0xf]
        %v335 = vld [vmem:[%s329 + $0x10] sm:$0xf]
        %v336 = vld [vmem:[%s329 + $0x14] sm:$0xf]
        %v337 = vld [vmem:[%s329 + $0x18] sm:$0xf]
        %v338 = vld [vmem:[%s329 + $0x1c] sm:$0xf]
        %v339 = vld [vmem:[%s329 + $0x20] sm:$0xf]
        %v340 = vld [vmem:[%s329 + $0x24] sm:$0xf]
        %v341 = vld [vmem:[%s329 + $0x28] sm:$0xf]
        %v342 = vld [vmem:[%s329 + $0x2c] sm:$0xf]
        %v343 = vld [vmem:[%s329 + $0x30] sm:$0xf]
        %v344 = vld [vmem:[%s329 + $0x34] sm:$0xf]
        %v345 = vld [vmem:[%s329 + $0x38] sm:$0xf]
        %v346 = vld [vmem:[%s329 + $0x3c] sm:$0xf]
        %v347 = vld [vmem:[%s329 + $0x40] sm:$0xf]
        %v348 = vld [vmem:[%s329 + $0x44] sm:$0xf]
        %v349 = vld [vmem:[%s329 + $0x48] sm:$0xf]
        %v350 = vld [vmem:[%s329 + $0x4c] sm:$0xf]
        %v351 = vld [vmem:[%s329 + $0x50] sm:$0xf]
        %v352 = vld [vmem:[%s329 + $0x54] sm:$0xf]
        %v353 = vld [vmem:[%s329 + $0x58] sm:$0xf]
        %v354 = vld [vmem:[%s329 + $0x5c] sm:$0xf]
        %v355 = vld [vmem:[%s329 + $0x60] sm:$0xf]
        %v356 = vld [vmem:[%s329 + $0x64] sm:$0xf]
        %v357 = vld [vmem:[%s329 + $0x68] sm:$0xf]
        %v358 = vld [vmem:[%s329 + $0x6c] sm:$0xf]
        %v359 = vld [vmem:[%s329 + $0x70] sm:$0xf]
        %v360 = vld [vmem:[%s329 + $0x74] sm:$0xf]
        %v361 = vld [vmem:[%s329 + $0x78] sm:$0xf]
        %v362 = vld [vmem:[%s329 + $0x7c] sm:$0xf]
        %v363 = vld [vmem:[%s1] sm:$0xf]
        %v364 = vld [vmem:[%s1 + $0x4] sm:$0xf]
        %v365 = vld [vmem:[%s1 + $0x8] sm:$0xf]
        %v366 = vld [vmem:[%s1 + $0xc] sm:$0xf]
        %v367 = vld [vmem:[%s1 + $0x10] sm:$0xf]
        %v368 = vld [vmem:[%s1 + $0x14] sm:$0xf]
        %v369 = vld [vmem:[%s1 + $0x18] sm:$0xf]
        %v370 = vld [vmem:[%s1 + $0x1c] sm:$0xf]
        %v371 = vld [vmem:[%s1 + $0x20] sm:$0xf]
        %v372 = vld [vmem:[%s1 + $0x24] sm:$0xf]
        %v373 = vld [vmem:[%s1 + $0x28] sm:$0xf]
        %v374 = vld [vmem:[%s1 + $0x2c] sm:$0xf]
        %v375 = vld [vmem:[%s1 + $0x30] sm:$0xf]
        %v376 = vld [vmem:[%s1 + $0x34] sm:$0xf]
        %v377 = vld [vmem:[%s1 + $0x38] sm:$0xf]
        %v378 = vld [vmem:[%s1 + $0x3c] sm:$0xf]
        %v379 = vld [vmem:[%s2] sm:$0x1]
        %v381 = vlaneseq
        %v382 = vshrl.u32 %v381, 7
        %v383 = vsub.s32 0, %v382
        %v384 = vrot.slane %v379, %v383
        %v418 = vunpack.c.l.b16 %v331
        %v419 = vunpack.c.l.b16 %v332
        %v420 = vunpack.c.l.b16 %v333
        %v421 = vunpack.c.l.b16 %v334
        %v422 = vunpack.c.l.b16 %v335
        %v423 = vunpack.c.l.b16 %v336
        %v424 = vunpack.c.l.b16 %v337
        %v425 = vunpack.c.l.b16 %v338
        %v426 = vunpack.c.l.b16 %v339
        %v427 = vunpack.c.l.b16 %v340
        %v428 = vunpack.c.l.b16 %v341
        %v429 = vunpack.c.l.b16 %v342
        %v430 = vunpack.c.l.b16 %v343
        %v431 = vunpack.c.l.b16 %v344
        %v432 = vunpack.c.l.b16 %v345
        %v433 = vunpack.c.l.b16 %v346
        %v434 = vunpack.c.l.b16 %v347
        %v435 = vunpack.c.l.b16 %v348
        %v436 = vunpack.c.l.b16 %v349
        %v437 = vunpack.c.l.b16 %v350
        %v438 = vunpack.c.l.b16 %v351
        %v439 = vunpack.c.l.b16 %v352
        %v440 = vunpack.c.l.b16 %v353
        %v441 = vunpack.c.l.b16 %v354
        %v442 = vunpack.c.l.b16 %v355
        %v443 = vunpack.c.l.b16 %v356
        %v444 = vunpack.c.l.b16 %v357
        %v445 = vunpack.c.l.b16 %v358
        %v446 = vunpack.c.l.b16 %v359
        %v447 = vunpack.c.l.b16 %v360
        %v448 = vunpack.c.l.b16 %v361
        %v449 = vunpack.c.l.b16 %v362
        %v450 = vpack.c.b16 %v419, %v418
        %v451 = vpack.c.b16 %v421, %v420
        %v452 = vpack.c.b16 %v423, %v422
        %v453 = vpack.c.b16 %v425, %v424
        %v454 = vpack.c.b16 %v427, %v426
        %v455 = vpack.c.b16 %v429, %v428
        %v456 = vpack.c.b16 %v431, %v430
        %v457 = vpack.c.b16 %v433, %v432
        %v458 = vpack.c.b16 %v435, %v434
        %v459 = vpack.c.b16 %v437, %v436
        %v460 = vpack.c.b16 %v439, %v438
        %v461 = vpack.c.b16 %v441, %v440
        %v462 = vpack.c.b16 %v443, %v442
        %v463 = vpack.c.b16 %v445, %v444
        %v464 = vpack.c.b16 %v447, %v446
        %v465 = vpack.c.b16 %v449, %v448
        %v498 = vunpack.c.l.b16 %v363
        %v499 = vunpack.c.l.b16 %v364
        %v500 = vunpack.c.l.b16 %v365
        %v501 = vunpack.c.l.b16 %v366
        %v502 = vunpack.c.l.b16 %v367
        %v503 = vunpack.c.l.b16 %v368
        %v504 = vunpack.c.l.b16 %v369
        %v505 = vunpack.c.l.b16 %v370
        %v506 = vunpack.c.l.b16 %v371
        %v507 = vunpack.c.l.b16 %v372
        %v508 = vunpack.c.l.b16 %v373
        %v509 = vunpack.c.l.b16 %v374
        %v510 = vunpack.c.l.b16 %v375
        %v511 = vunpack.c.l.b16 %v376
        %v512 = vunpack.c.l.b16 %v377
        %v513 = vunpack.c.l.b16 %v378
        %v514 = vpack.c.b16 %v499, %v498
        %v515 = vpack.c.b16 %v501, %v500
        %v516 = vpack.c.b16 %v503, %v502
        %v517 = vpack.c.b16 %v505, %v504
        %v518 = vpack.c.b16 %v507, %v506
        %v519 = vpack.c.b16 %v509, %v508
        %v520 = vpack.c.b16 %v511, %v510
        %v521 = vpack.c.b16 %v513, %v512
        %530 = vmatprep.subr.bf16.mxu0 0
        %531 = vmatpush1.bf16.msra.mxu0 %v514
        %532 = vmatprep.subr.bf16.mxu0 0
        %533 = vmatpush1.bf16.msra.mxu0 %v515
        %534 = vmatprep.subr.bf16.mxu0 0
        %535 = vmatpush1.bf16.msra.mxu0 %v516
        %536 = vmatprep.subr.bf16.mxu0 0
        %537 = vmatpush1.bf16.msra.mxu0 %v517
        %538 = vmatprep.subr.bf16.mxu0 0
        %539 = vmatpush1.bf16.msra.mxu0 %v518
        %540 = vmatprep.subr.bf16.mxu0 0
        %541 = vmatpush1.bf16.msra.mxu0 %v519
        %542 = vmatprep.subr.bf16.mxu0 0
        %543 = vmatpush1.bf16.msra.mxu0 %v520
        %544 = vmatprep.subr.bf16.mxu0 0
        %545 = vmatpush1.bf16.msra.mxu0 %v521
        %546 = vmatprep.subr.bf16.mxu0 0
        %547 = vmatpush1.bf16.msra.mxu0 0
        %548 = vmatprep.subr.bf16.mxu0 0
        %549 = vmatpush1.bf16.msra.mxu0 0
        %550 = vmatprep.subr.bf16.mxu0 0
        %551 = vmatpush1.bf16.msra.mxu0 0
        %552 = vmatprep.subr.bf16.mxu0 0
        %553 = vmatpush1.bf16.msra.mxu0 0
        %554 = vmatprep.subr.bf16.mxu0 0
        %555 = vmatpush1.bf16.msra.mxu0 0
        %556 = vmatprep.subr.bf16.mxu0 0
        %557 = vmatpush1.bf16.msra.mxu0 0
        %558 = vmatprep.subr.bf16.mxu0 0
        %559 = vmatpush1.bf16.msra.mxu0 0
        %560 = vmatprep.subr.bf16.mxu0 0
        %561 = vmatpush1.bf16.msra.mxu0 0
        %562 = vmatprep.mubr.bf16.mxu0 0
        %563 = vmatmul.mubr.bf16.gmra.mrb[0].mxu0 %v450
        %v564 = vpop.f32.mrb[0].mxu0
        %v565 = vadd.f32 %v384, %v564
        %v566 = vpop.f32.mrb[0].mxu0
        %v567 = vpop.f32.mrb[0].mxu0
        %v568 = vadd.f32 %v384, %v567
        %v569 = vpop.f32.mrb[0].mxu0
        %570 = vmatprep.mubr.bf16.mxu0 0
        %571 = vmatmul.mubr.bf16.gmra.mrb[0].mxu0 %v451
        %v572 = vpop.f32.mrb[0].mxu0
        %v573 = vadd.f32 %v384, %v572
        %v574 = vpop.f32.mrb[0].mxu0
        %v575 = vpop.f32.mrb[0].mxu0
        %v576 = vadd.f32 %v384, %v575
        %v577 = vpop.f32.mrb[0].mxu0
        %578 = vmatprep.mubr.bf16.mxu0 0
        %579 = vmatmul.mubr.bf16.gmra.mrb[0].mxu0 %v452
        %v580 = vpop.f32.mrb[0].mxu0
        %v581 = vadd.f32 %v384, %v580
        %v582 = vpop.f32.mrb[0].mxu0
        %v583 = vpop.f32.mrb[0].mxu0
        %v584 = vadd.f32 %v384, %v583
        %v585 = vpop.f32.mrb[0].mxu0
        %586 = vmatprep.mubr.bf16.mxu0 0
        %587 = vmatmul.mubr.bf16.gmra.mrb[0].mxu0 %v453
        %v588 = vpop.f32.mrb[0].mxu0
        %v589 = vadd.f32 %v384, %v588
        %v590 = vpop.f32.mrb[0].mxu0
        %v591 = vpop.f32.mrb[0].mxu0
        %v592 = vadd.f32 %v384, %v591
        %v593 = vpop.f32.mrb[0].mxu0
        %594 = vmatprep.mubr.bf16.mxu0 0
        %595 = vmatmul.mubr.bf16.gmra.mrb[0].mxu0 %v454
        %v596 = vpop.f32.mrb[0].mxu0
        %v597 = vadd.f32 %v384, %v596
        %v598 = vpop.f32.mrb[0].mxu0
        %v599 = vpop.f32.mrb[0].mxu0
        %v600 = vadd.f32 %v384, %v599
        %v601 = vpop.f32.mrb[0].mxu0
        %602 = vmatprep.mubr.bf16.mxu0 0
        %603 = vmatmul.mubr.bf16.gmra.mrb[0].mxu0 %v455
        %v604 = vpop.f32.mrb[0].mxu0
        %v605 = vadd.f32 %v384, %v604
        %v606 = vpop.f32.mrb[0].mxu0
        %v607 = vpop.f32.mrb[0].mxu0
        %v608 = vadd.f32 %v384, %v607
        %v609 = vpop.f32.mrb[0].mxu0
        %610 = vmatprep.mubr.bf16.mxu0 0
        %611 = vmatmul.mubr.bf16.gmra.mrb[0].mxu0 %v456
        %v612 = vpop.f32.mrb[0].mxu0
        %v613 = vadd.f32 %v384, %v612
        %v614 = vpop.f32.mrb[0].mxu0
        %v615 = vpop.f32.mrb[0].mxu0
        %v616 = vadd.f32 %v384, %v615
        %v617 = vpop.f32.mrb[0].mxu0
        %618 = vmatprep.mubr.bf16.mxu0 0
        %619 = vmatmul.mubr.bf16.gmra.mrb[0].mxu0 %v457
        %v620 = vpop.f32.mrb[0].mxu0
        %v621 = vadd.f32 %v384, %v620
        %v622 = vpop.f32.mrb[0].mxu0
        %v623 = vpop.f32.mrb[0].mxu0
        %v624 = vadd.f32 %v384, %v623
        %v625 = vpop.f32.mrb[0].mxu0
        %626 = vmatprep.mubr.bf16.mxu0 0
        %627 = vmatmul.mubr.bf16.gmra.mrb[0].mxu0 %v458
        %v628 = vpop.f32.mrb[0].mxu0
        %v629 = vadd.f32 %v384, %v628
        %v630 = vpop.f32.mrb[0].mxu0
        %v631 = vpop.f32.mrb[0].mxu0
        %v632 = vadd.f32 %v384, %v631
        %v633 = vpop.f32.mrb[0].mxu0
        %634 = vmatprep.mubr.bf16.mxu0 0
        %635 = vmatmul.mubr.bf16.gmra.mrb[0].mxu0 %v459
        %v636 = vpop.f32.mrb[0].mxu0
        %v637 = vadd.f32 %v384, %v636
        %v638 = vpop.f32.mrb[0].mxu0
        %v639 = vpop.f32.mrb[0].mxu0
        %v640 = vadd.f32 %v384, %v639
        %v641 = vpop.f32.mrb[0].mxu0
        %642 = vmatprep.mubr.bf16.mxu0 0
        %643 = vmatmul.mubr.bf16.gmra.mrb[0].mxu0 %v460
        %v644 = vpop.f32.mrb[0].mxu0
        %v645 = vadd.f32 %v384, %v644
        %v646 = vpop.f32.mrb[0].mxu0
        %v647 = vpop.f32.mrb[0].mxu0
        %v648 = vadd.f32 %v384, %v647
        %v649 = vpop.f32.mrb[0].mxu0
        %650 = vmatprep.mubr.bf16.mxu0 0
        %651 = vmatmul.mubr.bf16.gmra.mrb[0].mxu0 %v461
        %v652 = vpop.f32.mrb[0].mxu0
        %v653 = vadd.f32 %v384, %v652
        %v654 = vpop.f32.mrb[0].mxu0
        %v655 = vpop.f32.mrb[0].mxu0
        %v656 = vadd.f32 %v384, %v655
        %v657 = vpop.f32.mrb[0].mxu0
        %658 = vmatprep.mubr.bf16.mxu0 0
        %659 = vmatmul.mubr.bf16.gmra.mrb[0].mxu0 %v462
        %v660 = vpop.f32.mrb[0].mxu0
        %v661 = vadd.f32 %v384, %v660
        %v662 = vpop.f32.mrb[0].mxu0
        %v663 = vpop.f32.mrb[0].mxu0
        %v664 = vadd.f32 %v384, %v663
        %v665 = vpop.f32.mrb[0].mxu0
        %666 = vmatprep.mubr.bf16.mxu0 0
        %667 = vmatmul.mubr.bf16.gmra.mrb[0].mxu0 %v463
        %v668 = vpop.f32.mrb[0].mxu0
        %v669 = vadd.f32 %v384, %v668
        %v670 = vpop.f32.mrb[0].mxu0
        %v671 = vpop.f32.mrb[0].mxu0
        %v672 = vadd.f32 %v384, %v671
        %v673 = vpop.f32.mrb[0].mxu0
        %674 = vmatprep.mubr.bf16.mxu0 0
        %675 = vmatmul.mubr.bf16.gmra.mrb[0].mxu0 %v464
        %v676 = vpop.f32.mrb[0].mxu0
        %v677 = vadd.f32 %v384, %v676
        %v678 = vpop.f32.mrb[0].mxu0
        %v679 = vpop.f32.mrb[0].mxu0
        %v680 = vadd.f32 %v384, %v679
        %v681 = vpop.f32.mrb[0].mxu0
        %682 = vmatprep.mubr.bf16.mxu0 0
        %683 = vmatmul.mubr.bf16.gmra.mrb[0].mxu0 %v465
        %v684 = vpop.f32.mrb[0].mxu0
        %v685 = vadd.f32 %v384, %v684
        %v686 = vpop.f32.mrb[0].mxu0
        %v687 = vpop.f32.mrb[0].mxu0
        %v688 = vadd.f32 %v384, %v687
        %v689 = vpop.f32.mrb[0].mxu0
        %690 = vdwg.mxu0
        %v691 = vmax.f32 %v565, 0.0
        %v692 = vmax.f32 %v568, 0.0
        %v693 = vmax.f32 %v573, 0.0
        %v694 = vmax.f32 %v576, 0.0
        %v695 = vmax.f32 %v581, 0.0
        %v696 = vmax.f32 %v584, 0.0
        %v697 = vmax.f32 %v589, 0.0
        %v698 = vmax.f32 %v592, 0.0
        %v699 = vmax.f32 %v597, 0.0
        %v700 = vmax.f32 %v600, 0.0
        %v701 = vmax.f32 %v605, 0.0
        %v702 = vmax.f32 %v608, 0.0
        %v703 = vmax.f32 %v613, 0.0
        %v704 = vmax.f32 %v616, 0.0
        %v705 = vmax.f32 %v621, 0.0
        %v706 = vmax.f32 %v624, 0.0
        %v707 = vmax.f32 %v629, 0.0
        %v708 = vmax.f32 %v632, 0.0
        %v709 = vmax.f32 %v637, 0.0
        %v710 = vmax.f32 %v640, 0.0
        %v711 = vmax.f32 %v645, 0.0
        %v712 = vmax.f32 %v648, 0.0
        %v713 = vmax.f32 %v653, 0.0
        %v714 = vmax.f32 %v656, 0.0
        %v715 = vmax.f32 %v661, 0.0
        %v716 = vmax.f32 %v664, 0.0
        %v717 = vmax.f32 %v669, 0.0
        %v718 = vmax.f32 %v672, 0.0
        %v719 = vmax.f32 %v677, 0.0
        %v720 = vmax.f32 %v680, 0.0
        %v721 = vmax.f32 %v685, 0.0
        %v722 = vmax.f32 %v688, 0.0
        %v723 = vmax.f32 %v691, %v699
        %v724 = vmax.f32 %v692, %v700
        %v725 = vmax.f32 %v693, %v701
        %v726 = vmax.f32 %v694, %v702
        %v727 = vmax.f32 %v695, %v703
        %v728 = vmax.f32 %v696, %v704
        %v729 = vmax.f32 %v697, %v705
        %v730 = vmax.f32 %v698, %v706
        %v731 = vmax.f32 %v707, %v715
        %v732 = vmax.f32 %v708, %v716
        %v733 = vmax.f32 %v709, %v717
        %v734 = vmax.f32 %v710, %v718
        %v735 = vmax.f32 %v711, %v719
        %v736 = vmax.f32 %v712, %v720
        %v737 = vmax.f32 %v713, %v721
        %v738 = vmax.f32 %v714, %v722
        %v739 = vmax.f32 %v723, %v731
        %v740 = vmax.f32 %v724, %v732
        %v741 = vmax.f32 %v725, %v733
        %v742 = vmax.f32 %v726, %v734
        %v743 = vmax.f32 %v727, %v735
        %v744 = vmax.f32 %v728, %v736
        %v745 = vmax.f32 %v729, %v737
        %v746 = vmax.f32 %v730, %v738
        %747 = vxpose.xlu0.b32.start [1/16] %v739, 128
        %748 = vxpose.xlu0.b32.cont [2/16] %v740, 128
        %749 = vxpose.xlu0.b32.cont [3/16] %v741, 128
        %750 = vxpose.xlu0.b32.cont [4/16] %v742, 128
        %751 = vxpose.xlu0.b32.cont [5/16] %v743, 128
        %752 = vxpose.xlu0.b32.cont [6/16] %v744, 128
        %753 = vxpose.xlu0.b32.cont [7/16] %v745, 128
        %754 = vxpose.xlu0.b32.cont [8/16] %v746, 128
        %755 = vxpose.xlu0.b32.cont [9/16] 0.0, 128
        %756 = vxpose.xlu0.b32.cont [10/16] 0.0, 128
        %757 = vxpose.xlu0.b32.cont [11/16] 0.0, 128
        %758 = vxpose.xlu0.b32.cont [12/16] 0.0, 128
        %759 = vxpose.xlu0.b32.cont [13/16] 0.0, 128
        %760 = vxpose.xlu0.b32.cont [14/16] 0.0, 128
        %761 = vxpose.xlu0.b32.cont [15/16] 0.0, 128
        %762 = vxpose.xlu0.b32.end [16/16] 0.0, 128
        %v763 = vpop.trf.xlu0
        %v764 = vpop.trf.xlu0
        %v765 = vpop.trf.xlu0
        %v766 = vpop.trf.xlu0
        %v767 = vpop.trf.xlu0
        %v768 = vpop.trf.xlu0
        %v769 = vpop.trf.xlu0
        %v770 = vpop.trf.xlu0
        %v771 = vpop.trf.xlu0
        %v772 = vpop.trf.xlu0
        %v773 = vpop.trf.xlu0
        %v774 = vpop.trf.xlu0
        %v775 = vpop.trf.xlu0
        %v776 = vpop.trf.xlu0
        %v777 = vpop.trf.xlu0
        %v778 = vpop.trf.xlu0
        %v779 = vld [vmem:[%s4] sm:$0x3]
        %v780 = vpack.c.bf16 %v763, %v763
        %v781 = vld [vmem:[%s3] sm:$0xff]
        %v782 = vld [vmem:[%s3 + $0x8] sm:$0xff]
        %v783 = vld [vmem:[%s3 + $0x10] sm:$0xff]
        %v784 = vld [vmem:[%s3 + $0x18] sm:$0xff]
        %v785 = vld [vmem:[%s3 + $0x20] sm:$0xff]
        %v786 = vld [vmem:[%s3 + $0x28] sm:$0xff]
        %v787 = vld [vmem:[%s3 + $0x30] sm:$0xff]
        %v788 = vld [vmem:[%s3 + $0x38] sm:$0xff]
        %v797 = vunpack.c.l.b16 %v781
        %v798 = vunpack.c.h.b16 %v781
        %v799 = vunpack.c.l.b16 %v782
        %v800 = vunpack.c.h.b16 %v782
        %v801 = vunpack.c.l.b16 %v783
        %v802 = vunpack.c.h.b16 %v783
        %v803 = vunpack.c.l.b16 %v784
        %v804 = vunpack.c.h.b16 %v784
        %v805 = vunpack.c.l.b16 %v785
        %v806 = vunpack.c.h.b16 %v785
        %v807 = vunpack.c.l.b16 %v786
        %v808 = vunpack.c.h.b16 %v786
        %v809 = vunpack.c.l.b16 %v787
        %v810 = vunpack.c.h.b16 %v787
        %v811 = vunpack.c.l.b16 %v788
        %v812 = vunpack.c.h.b16 %v788
        %v813 = vpack.c.b16 %v799, %v797
        %v814 = vpack.c.b16 %v800, %v798
        %v815 = vpack.c.b16 %v803, %v801
        %v816 = vpack.c.b16 %v804, %v802
        %v817 = vpack.c.b16 %v807, %v805
        %v818 = vpack.c.b16 %v808, %v806
        %v819 = vpack.c.b16 %v811, %v809
        %v820 = vpack.c.b16 %v812, %v810
        %vm829 = vcmask 523264
        %v831 = vsel %vm829, %v780, 0
        %833 = vmatprep.subr.bf16.mxu0 %v814
        %834 = vmatpush1.bf16.msra.mxu0 %v813
        %835 = vmatprep.subr.bf16.mxu0 %v816
        %836 = vmatpush1.bf16.msra.mxu0 %v815
        %837 = vmatprep.subr.bf16.mxu0 %v818
        %838 = vmatpush1.bf16.msra.mxu0 %v817
        %839 = vmatprep.subr.bf16.mxu0 %v820
        %840 = vmatpush1.bf16.msra.mxu0 %v819
        %841 = vmatprep.subr.bf16.mxu0 0
        %842 = vmatpush1.bf16.msra.mxu0 0
        %843 = vmatprep.subr.bf16.mxu0 0
        %844 = vmatpush1.bf16.msra.mxu0 0
        %845 = vmatprep.subr.bf16.mxu0 0
        %846 = vmatpush1.bf16.msra.mxu0 0
        %847 = vmatprep.subr.bf16.mxu0 0
        %848 = vmatpush1.bf16.msra.mxu0 0
        %849 = vmatprep.subr.bf16.mxu0 0
        %850 = vmatpush1.bf16.msra.mxu0 0
        %851 = vmatprep.subr.bf16.mxu0 0
        %852 = vmatpush1.bf16.msra.mxu0 0
        %853 = vmatprep.subr.bf16.mxu0 0
        %854 = vmatpush1.bf16.msra.mxu0 0
        %855 = vmatprep.subr.bf16.mxu0 0
        %856 = vmatpush1.bf16.msra.mxu0 0
        %857 = vmatprep.subr.bf16.mxu0 0
        %858 = vmatpush1.bf16.msra.mxu0 0
        %859 = vmatprep.subr.bf16.mxu0 0
        %860 = vmatpush1.bf16.msra.mxu0 0
        %861 = vmatprep.subr.bf16.mxu0 0
        %862 = vmatpush1.bf16.msra.mxu0 0
        %863 = vmatprep.subr.bf16.mxu0 0
        %864 = vmatpush1.bf16.msra.mxu0 0
        %865 = vmatprep.mubr.bf16.mxu0 0
        %866 = vmatmul.mubr.bf16.gmra.mrb[0].mxu0 %v831
        %v867 = vpop.f32.mrb[0].mxu0
        %v868 = vadd.f32 0.0, %v867
        %v869 = vpop.f32.mrb[0].mxu0
        %v870 = vadd.f32 0.0, %v869
        %v871 = vpop.f32.mrb[0].mxu0
        %v872 = vpop.f32.mrb[0].mxu0
        %873 = vdwg.mxu0
        %v876 = vcombine.low %v868, %v870
        %v878 = vunpack.c.l.s4 1966171168
        %v879 = vunpack.c.0.s8 %v878
        %v880 = vlaneseq
        %v881 = vshrl.u32 %v880, 7
        %v882 = vsub.s32 %v879, %v881
        %v883 = vrot.slane %v876, %v882
        %v885 = vunpack.c.l.s4 1966171168
        %v886 = vunpack.c.0.s8 %v885
        %v887 = vlaneseq
        %v888 = vshrl.u32 %v887, 7
        %v889 = vsub.s32 %v886, %v888
        %v890 = vrot.slane %v883, %v889
        %v892 = vadd.f32 %v779, %v890
        %v893 = vld [vmem:[%s3 + $0x40] sm:$0xff]
        %v894 = vld [vmem:[%s3 + $0x48] sm:$0xff]
        %v895 = vld [vmem:[%s3 + $0x50] sm:$0xff]
        %v896 = vld [vmem:[%s3 + $0x58] sm:$0xff]
        %v897 = vld [vmem:[%s3 + $0x60] sm:$0xff]
        %v898 = vld [vmem:[%s3 + $0x68] sm:$0xff]
        %v899 = vld [vmem:[%s3 + $0x70] sm:$0xff]
        %v900 = vld [vmem:[%s3 + $0x78] sm:$0xff]
        %v901 = vshrl.u32 %v780, 16
        %v911 = vunpack.c.l.b16 %v893
        %v912 = vunpack.c.h.b16 %v893
        %v913 = vunpack.c.l.b16 %v894
        %v914 = vunpack.c.h.b16 %v894
        %v915 = vunpack.c.l.b16 %v895
        %v916 = vunpack.c.h.b16 %v895
        %v917 = vunpack.c.l.b16 %v896
        %v918 = vunpack.c.h.b16 %v896
        %v919 = vunpack.c.l.b16 %v897
        %v920 = vunpack.c.h.b16 %v897
        %v921 = vunpack.c.l.b16 %v898
        %v922 = vunpack.c.h.b16 %v898
        %v923 = vunpack.c.l.b16 %v899
        %v924 = vunpack.c.h.b16 %v899
        %v925 = vunpack.c.l.b16 %v900
        %v926 = vunpack.c.h.b16 %v900
        %v927 = vpack.c.b16 %v913, %v911
        %v928 = vpack.c.b16 %v914, %v912
        %v929 = vpack.c.b16 %v917, %v915
        %v930 = vpack.c.b16 %v918, %v916
        %v931 = vpack.c.b16 %v921, %v919
        %v932 = vpack.c.b16 %v922, %v920
        %v933 = vpack.c.b16 %v925, %v923
        %v934 = vpack.c.b16 %v926, %v924
        %v944 = vsel %vm829, %v901, 0
        %946 = vmatprep.subr.bf16.mxu0 %v928
        %947 = vmatpush1.bf16.msra.mxu0 %v927
        %948 = vmatprep.subr.bf16.mxu0 %v930
        %949 = vmatpush1.bf16.msra.mxu0 %v929
        %950 = vmatprep.subr.bf16.mxu0 %v932
        %951 = vmatpush1.bf16.msra.mxu0 %v931
        %952 = vmatprep.subr.bf16.mxu0 %v934
        %953 = vmatpush1.bf16.msra.mxu0 %v933
        %954 = vmatprep.subr.bf16.mxu0 0
        %955 = vmatpush1.bf16.msra.mxu0 0
        %956 = vmatprep.subr.bf16.mxu0 0
        %957 = vmatpush1.bf16.msra.mxu0 0
        %958 = vmatprep.subr.bf16.mxu0 0
        %959 = vmatpush1.bf16.msra.mxu0 0
        %960 = vmatprep.subr.bf16.mxu0 0
        %961 = vmatpush1.bf16.msra.mxu0 0
        %962 = vmatprep.subr.bf16.mxu0 0
        %963 = vmatpush1.bf16.msra.mxu0 0
        %964 = vmatprep.subr.bf16.mxu0 0
        %965 = vmatpush1.bf16.msra.mxu0 0
        %966 = vmatprep.subr.bf16.mxu0 0
        %967 = vmatpush1.bf16.msra.mxu0 0
        %968 = vmatprep.subr.bf16.mxu0 0
        %969 = vmatpush1.bf16.msra.mxu0 0
        %970 = vmatprep.subr.bf16.mxu0 0
        %971 = vmatpush1.bf16.msra.mxu0 0
        %972 = vmatprep.subr.bf16.mxu0 0
        %973 = vmatpush1.bf16.msra.mxu0 0
        %974 = vmatprep.subr.bf16.mxu0 0
        %975 = vmatpush1.bf16.msra.mxu0 0
        %976 = vmatprep.subr.bf16.mxu0 0
        %977 = vmatpush1.bf16.msra.mxu0 0
        %978 = vmatprep.mubr.bf16.mxu0 0
        %979 = vmatmul.mubr.bf16.gmra.mrb[0].mxu0 %v944
        %v980 = vpop.f32.mrb[0].mxu0
        %v981 = vadd.f32 0.0, %v980
        %v982 = vpop.f32.mrb[0].mxu0
        %v983 = vadd.f32 0.0, %v982
        %v984 = vpop.f32.mrb[0].mxu0
        %v985 = vpop.f32.mrb[0].mxu0
        %986 = vdwg.mxu0
        %v989 = vcombine.low %v981, %v983
        %v991 = vunpack.c.l.s4 1966171168
        %v992 = vunpack.c.0.s8 %v991
        %v993 = vlaneseq
        %v994 = vshrl.u32 %v993, 7
        %v995 = vsub.s32 %v992, %v994
        %v996 = vrot.slane %v989, %v995
        %v998 = vunpack.c.l.s4 1966171168
        %v999 = vunpack.c.0.s8 %v998
        %v1000 = vlaneseq
        %v1001 = vshrl.u32 %v1000, 7
        %v1002 = vsub.s32 %v999, %v1001
        %v1003 = vrot.slane %v996, %v1002
        %v1005 = vadd.f32 %v892, %v1003
        %v1006 = vld [vmem:[%s3 + $0x80] sm:$0xff]
        %v1007 = vld [vmem:[%s3 + $0x88] sm:$0xff]
        %v1008 = vld [vmem:[%s3 + $0x90] sm:$0xff]
        %v1009 = vld [vmem:[%s3 + $0x98] sm:$0xff]
        %v1010 = vld [vmem:[%s3 + $0xa0] sm:$0xff]
        %v1011 = vld [vmem:[%s3 + $0xa8] sm:$0xff]
        %v1012 = vld [vmem:[%s3 + $0xb0] sm:$0xff]
        %v1013 = vld [vmem:[%s3 + $0xb8] sm:$0xff]
        %v1015 = vrot.slane %v780, 1
        %v1024 = vunpack.c.l.b16 %v1006
        %v1025 = vunpack.c.h.b16 %v1006
        %v1026 = vunpack.c.l.b16 %v1007
        %v1027 = vunpack.c.h.b16 %v1007
        %v1028 = vunpack.c.l.b16 %v1008
        %v1029 = vunpack.c.h.b16 %v1008
        %v1030 = vunpack.c.l.b16 %v1009
        %v1031 = vunpack.c.h.b16 %v1009
        %v1032 = vunpack.c.l.b16 %v1010
        %v1033 = vunpack.c.h.b16 %v1010
        %v1034 = vunpack.c.l.b16 %v1011
        %v1035 = vunpack.c.h.b16 %v1011
        %v1036 = vunpack.c.l.b16 %v1012
        %v1037 = vunpack.c.h.b16 %v1012
        %v1038 = vunpack.c.l.b16 %v1013
        %v1039 = vunpack.c.h.b16 %v1013
        %v1040 = vpack.c.b16 %v1026, %v1024
        %v1041 = vpack.c.b16 %v1027, %v1025
        %v1042 = vpack.c.b16 %v1030, %v1028
        %v1043 = vpack.c.b16 %v1031, %v1029
        %v1044 = vpack.c.b16 %v1034, %v1032
        %v1045 = vpack.c.b16 %v1035, %v1033
        %v1046 = vpack.c.b16 %v1038, %v1036
        %v1047 = vpack.c.b16 %v1039, %v1037
        %v1057 = vsel %vm829, %v1015, 0
        %1059 = vmatprep.subr.bf16.mxu0 %v1041
        %1060 = vmatpush1.bf16.msra.mxu0 %v1040
        %1061 = vmatprep.subr.bf16.mxu0 %v1043
        %1062 = vmatpush1.bf16.msra.mxu0 %v1042
        %1063 = vmatprep.subr.bf16.mxu0 %v1045
        %1064 = vmatpush1.bf16.msra.mxu0 %v1044
        %1065 = vmatprep.subr.bf16.mxu0 %v1047
        %1066 = vmatpush1.bf16.msra.mxu0 %v1046
        %1067 = vmatprep.subr.bf16.mxu0 0
        %1068 = vmatpush1.bf16.msra.mxu0 0
        %1069 = vmatprep.subr.bf16.mxu0 0
        %1070 = vmatpush1.bf16.msra.mxu0 0
        %1071 = vmatprep.subr.bf16.mxu0 0
        %1072 = vmatpush1.bf16.msra.mxu0 0
        %1073 = vmatprep.subr.bf16.mxu0 0
        %1074 = vmatpush1.bf16.msra.mxu0 0
        %1075 = vmatprep.subr.bf16.mxu0 0
        %1076 = vmatpush1.bf16.msra.mxu0 0
        %1077 = vmatprep.subr.bf16.mxu0 0
        %1078 = vmatpush1.bf16.msra.mxu0 0
        %1079 = vmatprep.subr.bf16.mxu0 0
        %1080 = vmatpush1.bf16.msra.mxu0 0
        %1081 = vmatprep.subr.bf16.mxu0 0
        %1082 = vmatpush1.bf16.msra.mxu0 0
        %1083 = vmatprep.subr.bf16.mxu0 0
        %1084 = vmatpush1.bf16.msra.mxu0 0
        %1085 = vmatprep.subr.bf16.mxu0 0
        %1086 = vmatpush1.bf16.msra.mxu0 0
        %1087 = vmatprep.subr.bf16.mxu0 0
        %1088 = vmatpush1.bf16.msra.mxu0 0
        %1089 = vmatprep.subr.bf16.mxu0 0
        %1090 = vmatpush1.bf16.msra.mxu0 0
        %1091 = vmatprep.mubr.bf16.mxu0 0
        %1092 = vmatmul.mubr.bf16.gmra.mrb[0].mxu0 %v1057
        %v1093 = vpop.f32.mrb[0].mxu0
        %v1094 = vadd.f32 0.0, %v1093
        %v1095 = vpop.f32.mrb[0].mxu0
        %v1096 = vadd.f32 0.0, %v1095
        %v1097 = vpop.f32.mrb[0].mxu0
        %v1098 = vpop.f32.mrb[0].mxu0
        %1099 = vdwg.mxu0
        %v1102 = vcombine.low %v1094, %v1096
        %v1104 = vunpack.c.l.s4 1966171168
        %v1105 = vunpack.c.0.s8 %v1104
        %v1106 = vlaneseq
        %v1107 = vshrl.u32 %v1106, 7
        %v1108 = vsub.s32 %v1105, %v1107
        %v1109 = vrot.slane %v1102, %v1108
        %v1111 = vunpack.c.l.s4 1966171168
        %v1112 = vunpack.c.0.s8 %v1111
        %v1113 = vlaneseq
        %v1114 = vshrl.u32 %v1113, 7
        %v1115 = vsub.s32 %v1112, %v1114
        %v1116 = vrot.slane %v1109, %v1115
        %v1118 = vadd.f32 %v1005, %v1116
        %v1119 = vld [vmem:[%s3 + $0xc0] sm:$0xff]
        %v1120 = vld [vmem:[%s3 + $0xc8] sm:$0xff]
        %v1121 = vld [vmem:[%s3 + $0xd0] sm:$0xff]
        %v1122 = vld [vmem:[%s3 + $0xd8] sm:$0xff]
        %v1123 = vld [vmem:[%s3 + $0xe0] sm:$0xff]
        %v1124 = vld [vmem:[%s3 + $0xe8] sm:$0xff]
        %v1125 = vld [vmem:[%s3 + $0xf0] sm:$0xff]
        %v1126 = vld [vmem:[%s3 + $0xf8] sm:$0xff]
        %v1127 = vrot.slane %v901, 1
        %v1136 = vunpack.c.l.b16 %v1119
        %v1137 = vunpack.c.h.b16 %v1119
        %v1138 = vunpack.c.l.b16 %v1120
        %v1139 = vunpack.c.h.b16 %v1120
        %v1140 = vunpack.c.l.b16 %v1121
        %v1141 = vunpack.c.h.b16 %v1121
        %v1142 = vunpack.c.l.b16 %v1122
        %v1143 = vunpack.c.h.b16 %v1122
        %v1144 = vunpack.c.l.b16 %v1123
        %v1145 = vunpack.c.h.b16 %v1123
        %v1146 = vunpack.c.l.b16 %v1124
        %v1147 = vunpack.c.h.b16 %v1124
        %v1148 = vunpack.c.l.b16 %v1125
        %v1149 = vunpack.c.h.b16 %v1125
        %v1150 = vunpack.c.l.b16 %v1126
        %v1151 = vunpack.c.h.b16 %v1126
        %v1152 = vpack.c.b16 %v1138, %v1136
        %v1153 = vpack.c.b16 %v1139, %v1137
        %v1154 = vpack.c.b16 %v1142, %v1140
        %v1155 = vpack.c.b16 %v1143, %v1141
        %v1156 = vpack.c.b16 %v1146, %v1144
        %v1157 = vpack.c.b16 %v1147, %v1145
        %v1158 = vpack.c.b16 %v1150, %v1148
        %v1159 = vpack.c.b16 %v1151, %v1149
        %v1169 = vsel %vm829, %v1127, 0
        %1171 = vmatprep.subr.bf16.mxu0 %v1153
        %1172 = vmatpush1.bf16.msra.mxu0 %v1152
        %1173 = vmatprep.subr.bf16.mxu0 %v1155
        %1174 = vmatpush1.bf16.msra.mxu0 %v1154
        %1175 = vmatprep.subr.bf16.mxu0 %v1157
        %1176 = vmatpush1.bf16.msra.mxu0 %v1156
        %1177 = vmatprep.subr.bf16.mxu0 %v1159
        %1178 = vmatpush1.bf16.msra.mxu0 %v1158
        %1179 = vmatprep.subr.bf16.mxu0 0
        %1180 = vmatpush1.bf16.msra.mxu0 0
        %1181 = vmatprep.subr.bf16.mxu0 0
        %1182 = vmatpush1.bf16.msra.mxu0 0
        %1183 = vmatprep.subr.bf16.mxu0 0
        %1184 = vmatpush1.bf16.msra.mxu0 0
        %1185 = vmatprep.subr.bf16.mxu0 0
        %1186 = vmatpush1.bf16.msra.mxu0 0
        %1187 = vmatprep.subr.bf16.mxu0 0
        %1188 = vmatpush1.bf16.msra.mxu0 0
        %1189 = vmatprep.subr.bf16.mxu0 0
        %1190 = vmatpush1.bf16.msra.mxu0 0
        %1191 = vmatprep.subr.bf16.mxu0 0
        %1192 = vmatpush1.bf16.msra.mxu0 0
        %1193 = vmatprep.subr.bf16.mxu0 0
        %1194 = vmatpush1.bf16.msra.mxu0 0
        %1195 = vmatprep.subr.bf16.mxu0 0
        %1196 = vmatpush1.bf16.msra.mxu0 0
        %1197 = vmatprep.subr.bf16.mxu0 0
        %1198 = vmatpush1.bf16.msra.mxu0 0
        %1199 = vmatprep.subr.bf16.mxu0 0
        %1200 = vmatpush1.bf16.msra.mxu0 0
        %1201 = vmatprep.subr.bf16.mxu0 0
        %1202 = vmatpush1.bf16.msra.mxu0 0
        %1203 = vmatprep.mubr.bf16.mxu0 0
        %1204 = vmatmul.mubr.bf16.gmra.mrb[0].mxu0 %v1169
        %v1205 = vpop.f32.mrb[0].mxu0
        %v1206 = vadd.f32 0.0, %v1205
        %v1207 = vpop.f32.mrb[0].mxu0
        %v1208 = vadd.f32 0.0, %v1207
        %v1209 = vpop.f32.mrb[0].mxu0
        %v1210 = vpop.f32.mrb[0].mxu0
        %1211 = vdwg.mxu0
        %v1214 = vcombine.low %v1206, %v1208
        %v1216 = vunpack.c.l.s4 1966171168
        %v1217 = vunpack.c.0.s8 %v1216
        %v1218 = vlaneseq
        %v1219 = vshrl.u32 %v1218, 7
        %v1220 = vsub.s32 %v1217, %v1219
        %v1221 = vrot.slane %v1214, %v1220
        %v1223 = vunpack.c.l.s4 1966171168
        %v1224 = vunpack.c.0.s8 %v1223
        %v1225 = vlaneseq
        %v1226 = vshrl.u32 %v1225, 7
        %v1227 = vsub.s32 %v1224, %v1226
        %v1228 = vrot.slane %v1221, %v1227
        %v1230 = vadd.f32 %v1118, %v1228
        %v1231 = vld [vmem:[%s3 + $0x100] sm:$0xff]
        %v1232 = vld [vmem:[%s3 + $0x108] sm:$0xff]
        %v1233 = vld [vmem:[%s3 + $0x110] sm:$0xff]
        %v1234 = vld [vmem:[%s3 + $0x118] sm:$0xff]
        %v1235 = vld [vmem:[%s3 + $0x120] sm:$0xff]
        %v1236 = vld [vmem:[%s3 + $0x128] sm:$0xff]
        %v1237 = vld [vmem:[%s3 + $0x130] sm:$0xff]
        %v1238 = vld [vmem:[%s3 + $0x138] sm:$0xff]
        %v1239 = vrot.slane %v780, 2
        %v1248 = vunpack.c.l.b16 %v1231
        %v1249 = vunpack.c.h.b16 %v1231
        %v1250 = vunpack.c.l.b16 %v1232
        %v1251 = vunpack.c.h.b16 %v1232
        %v1252 = vunpack.c.l.b16 %v1233
        %v1253 = vunpack.c.h.b16 %v1233
        %v1254 = vunpack.c.l.b16 %v1234
        %v1255 = vunpack.c.h.b16 %v1234
        %v1256 = vunpack.c.l.b16 %v1235
        %v1257 = vunpack.c.h.b16 %v1235
        %v1258 = vunpack.c.l.b16 %v1236
        %v1259 = vunpack.c.h.b16 %v1236
        %v1260 = vunpack.c.l.b16 %v1237
        %v1261 = vunpack.c.h.b16 %v1237
        %v1262 = vunpack.c.l.b16 %v1238
        %v1263 = vunpack.c.h.b16 %v1238
        %v1264 = vpack.c.b16 %v1250, %v1248
        %v1265 = vpack.c.b16 %v1251, %v1249
        %v1266 = vpack.c.b16 %v1254, %v1252
        %v1267 = vpack.c.b16 %v1255, %v1253
        %v1268 = vpack.c.b16 %v1258, %v1256
        %v1269 = vpack.c.b16 %v1259, %v1257
        %v1270 = vpack.c.b16 %v1262, %v1260
        %v1271 = vpack.c.b16 %v1263, %v1261
        %v1281 = vsel %vm829, %v1239, 0
        %1283 = vmatprep.subr.bf16.mxu0 %v1265
        %1284 = vmatpush1.bf16.msra.mxu0 %v1264
        %1285 = vmatprep.subr.bf16.mxu0 %v1267
        %1286 = vmatpush1.bf16.msra.mxu0 %v1266
        %1287 = vmatprep.subr.bf16.mxu0 %v1269
        %1288 = vmatpush1.bf16.msra.mxu0 %v1268
        %1289 = vmatprep.subr.bf16.mxu0 %v1271
        %1290 = vmatpush1.bf16.msra.mxu0 %v1270
        %1291 = vmatprep.subr.bf16.mxu0 0
        %1292 = vmatpush1.bf16.msra.mxu0 0
        %1293 = vmatprep.subr.bf16.mxu0 0
        %1294 = vmatpush1.bf16.msra.mxu0 0
        %1295 = vmatprep.subr.bf16.mxu0 0
        %1296 = vmatpush1.bf16.msra.mxu0 0
        %1297 = vmatprep.subr.bf16.mxu0 0
        %1298 = vmatpush1.bf16.msra.mxu0 0
        %1299 = vmatprep.subr.bf16.mxu0 0
        %1300 = vmatpush1.bf16.msra.mxu0 0
        %1301 = vmatprep.subr.bf16.mxu0 0
        %1302 = vmatpush1.bf16.msra.mxu0 0
        %1303 = vmatprep.subr.bf16.mxu0 0
        %1304 = vmatpush1.bf16.msra.mxu0 0
        %1305 = vmatprep.subr.bf16.mxu0 0
        %1306 = vmatpush1.bf16.msra.mxu0 0
        %1307 = vmatprep.subr.bf16.mxu0 0
        %1308 = vmatpush1.bf16.msra.mxu0 0
        %1309 = vmatprep.subr.bf16.mxu0 0
        %1310 = vmatpush1.bf16.msra.mxu0 0
        %1311 = vmatprep.subr.bf16.mxu0 0
        %1312 = vmatpush1.bf16.msra.mxu0 0
        %1313 = vmatprep.subr.bf16.mxu0 0
        %1314 = vmatpush1.bf16.msra.mxu0 0
        %1315 = vmatprep.mubr.bf16.mxu0 0
        %1316 = vmatmul.mubr.bf16.gmra.mrb[0].mxu0 %v1281
        %v1317 = vpop.f32.mrb[0].mxu0
        %v1318 = vadd.f32 0.0, %v1317
        %v1319 = vpop.f32.mrb[0].mxu0
        %v1320 = vadd.f32 0.0, %v1319
        %v1321 = vpop.f32.mrb[0].mxu0
        %v1322 = vpop.f32.mrb[0].mxu0
        %1323 = vdwg.mxu0
        %v1326 = vcombine.low %v1318, %v1320
        %v1328 = vunpack.c.l.s4 1966171168
        %v1329 = vunpack.c.0.s8 %v1328
        %v1330 = vlaneseq
        %v1331 = vshrl.u32 %v1330, 7
        %v1332 = vsub.s32 %v1329, %v1331
        %v1333 = vrot.slane %v1326, %v1332
        %v1335 = vunpack.c.l.s4 1966171168
        %v1336 = vunpack.c.0.s8 %v1335
        %v1337 = vlaneseq
        %v1338 = vshrl.u32 %v1337, 7
        %v1339 = vsub.s32 %v1336, %v1338
        %v1340 = vrot.slane %v1333, %v1339
        %v1342 = vadd.f32 %v1230, %v1340
        %v1343 = vld [vmem:[%s3 + $0x140] sm:$0xff]
        %v1344 = vld [vmem:[%s3 + $0x148] sm:$0xff]
        %v1345 = vld [vmem:[%s3 + $0x150] sm:$0xff]
        %v1346 = vld [vmem:[%s3 + $0x158] sm:$0xff]
        %v1347 = vld [vmem:[%s3 + $0x160] sm:$0xff]
        %v1348 = vld [vmem:[%s3 + $0x168] sm:$0xff]
        %v1349 = vld [vmem:[%s3 + $0x170] sm:$0xff]
        %v1350 = vld [vmem:[%s3 + $0x178] sm:$0xff]
        %v1351 = vrot.slane %v901, 2
        %v1360 = vunpack.c.l.b16 %v1343
        %v1361 = vunpack.c.h.b16 %v1343
        %v1362 = vunpack.c.l.b16 %v1344
        %v1363 = vunpack.c.h.b16 %v1344
        %v1364 = vunpack.c.l.b16 %v1345
        %v1365 = vunpack.c.h.b16 %v1345
        %v1366 = vunpack.c.l.b16 %v1346
        %v1367 = vunpack.c.h.b16 %v1346
        %v1368 = vunpack.c.l.b16 %v1347
        %v1369 = vunpack.c.h.b16 %v1347
        %v1370 = vunpack.c.l.b16 %v1348
        %v1371 = vunpack.c.h.b16 %v1348
        %v1372 = vunpack.c.l.b16 %v1349
        %v1373 = vunpack.c.h.b16 %v1349
        %v1374 = vunpack.c.l.b16 %v1350
        %v1375 = vunpack.c.h.b16 %v1350
        %v1376 = vpack.c.b16 %v1362, %v1360
        %v1377 = vpack.c.b16 %v1363, %v1361
        %v1378 = vpack.c.b16 %v1366, %v1364
        %v1379 = vpack.c.b16 %v1367, %v1365
        %v1380 = vpack.c.b16 %v1370, %v1368
        %v1381 = vpack.c.b16 %v1371, %v1369
        %v1382 = vpack.c.b16 %v1374, %v1372
        %v1383 = vpack.c.b16 %v1375, %v1373
        %v1393 = vsel %vm829, %v1351, 0
        %1395 = vmatprep.subr.bf16.mxu0 %v1377
        %1396 = vmatpush1.bf16.msra.mxu0 %v1376
        %1397 = vmatprep.subr.bf16.mxu0 %v1379
        %1398 = vmatpush1.bf16.msra.mxu0 %v1378
        %1399 = vmatprep.subr.bf16.mxu0 %v1381
        %1400 = vmatpush1.bf16.msra.mxu0 %v1380
        %1401 = vmatprep.subr.bf16.mxu0 %v1383
        %1402 = vmatpush1.bf16.msra.mxu0 %v1382
        %1403 = vmatprep.subr.bf16.mxu0 0
        %1404 = vmatpush1.bf16.msra.mxu0 0
        %1405 = vmatprep.subr.bf16.mxu0 0
        %1406 = vmatpush1.bf16.msra.mxu0 0
        %1407 = vmatprep.subr.bf16.mxu0 0
        %1408 = vmatpush1.bf16.msra.mxu0 0
        %1409 = vmatprep.subr.bf16.mxu0 0
        %1410 = vmatpush1.bf16.msra.mxu0 0
        %1411 = vmatprep.subr.bf16.mxu0 0
        %1412 = vmatpush1.bf16.msra.mxu0 0
        %1413 = vmatprep.subr.bf16.mxu0 0
        %1414 = vmatpush1.bf16.msra.mxu0 0
        %1415 = vmatprep.subr.bf16.mxu0 0
        %1416 = vmatpush1.bf16.msra.mxu0 0
        %1417 = vmatprep.subr.bf16.mxu0 0
        %1418 = vmatpush1.bf16.msra.mxu0 0
        %1419 = vmatprep.subr.bf16.mxu0 0
        %1420 = vmatpush1.bf16.msra.mxu0 0
        %1421 = vmatprep.subr.bf16.mxu0 0
        %1422 = vmatpush1.bf16.msra.mxu0 0
        %1423 = vmatprep.subr.bf16.mxu0 0
        %1424 = vmatpush1.bf16.msra.mxu0 0
        %1425 = vmatprep.subr.bf16.mxu0 0
        %1426 = vmatpush1.bf16.msra.mxu0 0
        %1427 = vmatprep.mubr.bf16.mxu0 0
        %1428 = vmatmul.mubr.bf16.gmra.mrb[0].mxu0 %v1393
        %v1429 = vpop.f32.mrb[0].mxu0
        %v1430 = vadd.f32 0.0, %v1429
        %v1431 = vpop.f32.mrb[0].mxu0
        %v1432 = vadd.f32 0.0, %v1431
        %v1433 = vpop.f32.mrb[0].mxu0
        %v1434 = vpop.f32.mrb[0].mxu0
        %1435 = vdwg.mxu0
        %v1438 = vcombine.low %v1430, %v1432
        %v1440 = vunpack.c.l.s4 1966171168
        %v1441 = vunpack.c.0.s8 %v1440
        %v1442 = vlaneseq
        %v1443 = vshrl.u32 %v1442, 7
        %v1444 = vsub.s32 %v1441, %v1443
        %v1445 = vrot.slane %v1438, %v1444
        %v1447 = vunpack.c.l.s4 1966171168
        %v1448 = vunpack.c.0.s8 %v1447
        %v1449 = vlaneseq
        %v1450 = vshrl.u32 %v1449, 7
        %v1451 = vsub.s32 %v1448, %v1450
        %v1452 = vrot.slane %v1445, %v1451
        %v1454 = vadd.f32 %v1342, %v1452
        %v1455 = vld [vmem:[%s3 + $0x180] sm:$0xff]
        %v1456 = vld [vmem:[%s3 + $0x188] sm:$0xff]
        %v1457 = vld [vmem:[%s3 + $0x190] sm:$0xff]
        %v1458 = vld [vmem:[%s3 + $0x198] sm:$0xff]
        %v1459 = vld [vmem:[%s3 + $0x1a0] sm:$0xff]
        %v1460 = vld [vmem:[%s3 + $0x1a8] sm:$0xff]
        %v1461 = vld [vmem:[%s3 + $0x1b0] sm:$0xff]
        %v1462 = vld [vmem:[%s3 + $0x1b8] sm:$0xff]
        %v1463 = vrot.slane %v780, 3
        %v1472 = vunpack.c.l.b16 %v1455
        %v1473 = vunpack.c.h.b16 %v1455
        %v1474 = vunpack.c.l.b16 %v1456
        %v1475 = vunpack.c.h.b16 %v1456
        %v1476 = vunpack.c.l.b16 %v1457
        %v1477 = vunpack.c.h.b16 %v1457
        %v1478 = vunpack.c.l.b16 %v1458
        %v1479 = vunpack.c.h.b16 %v1458
        %v1480 = vunpack.c.l.b16 %v1459
        %v1481 = vunpack.c.h.b16 %v1459
        %v1482 = vunpack.c.l.b16 %v1460
        %v1483 = vunpack.c.h.b16 %v1460
        %v1484 = vunpack.c.l.b16 %v1461
        %v1485 = vunpack.c.h.b16 %v1461
        %v1486 = vunpack.c.l.b16 %v1462
        %v1487 = vunpack.c.h.b16 %v1462
        %v1488 = vpack.c.b16 %v1474, %v1472
        %v1489 = vpack.c.b16 %v1475, %v1473
        %v1490 = vpack.c.b16 %v1478, %v1476
        %v1491 = vpack.c.b16 %v1479, %v1477
        %v1492 = vpack.c.b16 %v1482, %v1480
        %v1493 = vpack.c.b16 %v1483, %v1481
        %v1494 = vpack.c.b16 %v1486, %v1484
        %v1495 = vpack.c.b16 %v1487, %v1485
        %v1505 = vsel %vm829, %v1463, 0
        %1507 = vmatprep.subr.bf16.mxu0 %v1489
        %1508 = vmatpush1.bf16.msra.mxu0 %v1488
        %1509 = vmatprep.subr.bf16.mxu0 %v1491
        %1510 = vmatpush1.bf16.msra.mxu0 %v1490
        %1511 = vmatprep.subr.bf16.mxu0 %v1493
        %1512 = vmatpush1.bf16.msra.mxu0 %v1492
        %1513 = vmatprep.subr.bf16.mxu0 %v1495
        %1514 = vmatpush1.bf16.msra.mxu0 %v1494
        %1515 = vmatprep.subr.bf16.mxu0 0
        %1516 = vmatpush1.bf16.msra.mxu0 0
        %1517 = vmatprep.subr.bf16.mxu0 0
        %1518 = vmatpush1.bf16.msra.mxu0 0
        %1519 = vmatprep.subr.bf16.mxu0 0
        %1520 = vmatpush1.bf16.msra.mxu0 0
        %1521 = vmatprep.subr.bf16.mxu0 0
        %1522 = vmatpush1.bf16.msra.mxu0 0
        %1523 = vmatprep.subr.bf16.mxu0 0
        %1524 = vmatpush1.bf16.msra.mxu0 0
        %1525 = vmatprep.subr.bf16.mxu0 0
        %1526 = vmatpush1.bf16.msra.mxu0 0
        %1527 = vmatprep.subr.bf16.mxu0 0
        %1528 = vmatpush1.bf16.msra.mxu0 0
        %1529 = vmatprep.subr.bf16.mxu0 0
        %1530 = vmatpush1.bf16.msra.mxu0 0
        %1531 = vmatprep.subr.bf16.mxu0 0
        %1532 = vmatpush1.bf16.msra.mxu0 0
        %1533 = vmatprep.subr.bf16.mxu0 0
        %1534 = vmatpush1.bf16.msra.mxu0 0
        %1535 = vmatprep.subr.bf16.mxu0 0
        %1536 = vmatpush1.bf16.msra.mxu0 0
        %1537 = vmatprep.subr.bf16.mxu0 0
        %1538 = vmatpush1.bf16.msra.mxu0 0
        %1539 = vmatprep.mubr.bf16.mxu0 0
        %1540 = vmatmul.mubr.bf16.gmra.mrb[0].mxu0 %v1505
        %v1541 = vpop.f32.mrb[0].mxu0
        %v1542 = vadd.f32 0.0, %v1541
        %v1543 = vpop.f32.mrb[0].mxu0
        %v1544 = vadd.f32 0.0, %v1543
        %v1545 = vpop.f32.mrb[0].mxu0
        %v1546 = vpop.f32.mrb[0].mxu0
        %1547 = vdwg.mxu0
        %v1550 = vcombine.low %v1542, %v1544
        %v1552 = vunpack.c.l.s4 1966171168
        %v1553 = vunpack.c.0.s8 %v1552
        %v1554 = vlaneseq
        %v1555 = vshrl.u32 %v1554, 7
        %v1556 = vsub.s32 %v1553, %v1555
        %v1557 = vrot.slane %v1550, %v1556
        %v1559 = vunpack.c.l.s4 1966171168
        %v1560 = vunpack.c.0.s8 %v1559
        %v1561 = vlaneseq
        %v1562 = vshrl.u32 %v1561, 7
        %v1563 = vsub.s32 %v1560, %v1562
        %v1564 = vrot.slane %v1557, %v1563
        %v1566 = vadd.f32 %v1454, %v1564
        %v1567 = vld [vmem:[%s3 + $0x1c0] sm:$0xff]
        %v1568 = vld [vmem:[%s3 + $0x1c8] sm:$0xff]
        %v1569 = vld [vmem:[%s3 + $0x1d0] sm:$0xff]
        %v1570 = vld [vmem:[%s3 + $0x1d8] sm:$0xff]
        %v1571 = vld [vmem:[%s3 + $0x1e0] sm:$0xff]
        %v1572 = vld [vmem:[%s3 + $0x1e8] sm:$0xff]
        %v1573 = vld [vmem:[%s3 + $0x1f0] sm:$0xff]
        %v1574 = vld [vmem:[%s3 + $0x1f8] sm:$0xff]
        %v1575 = vrot.slane %v901, 3
        %v1584 = vunpack.c.l.b16 %v1567
        %v1585 = vunpack.c.h.b16 %v1567
        %v1586 = vunpack.c.l.b16 %v1568
        %v1587 = vunpack.c.h.b16 %v1568
        %v1588 = vunpack.c.l.b16 %v1569
        %v1589 = vunpack.c.h.b16 %v1569
        %v1590 = vunpack.c.l.b16 %v1570
        %v1591 = vunpack.c.h.b16 %v1570
        %v1592 = vunpack.c.l.b16 %v1571
        %v1593 = vunpack.c.h.b16 %v1571
        %v1594 = vunpack.c.l.b16 %v1572
        %v1595 = vunpack.c.h.b16 %v1572
        %v1596 = vunpack.c.l.b16 %v1573
        %v1597 = vunpack.c.h.b16 %v1573
        %v1598 = vunpack.c.l.b16 %v1574
        %v1599 = vunpack.c.h.b16 %v1574
        %v1600 = vpack.c.b16 %v1586, %v1584
        %v1601 = vpack.c.b16 %v1587, %v1585
        %v1602 = vpack.c.b16 %v1590, %v1588
        %v1603 = vpack.c.b16 %v1591, %v1589
        %v1604 = vpack.c.b16 %v1594, %v1592
        %v1605 = vpack.c.b16 %v1595, %v1593
        %v1606 = vpack.c.b16 %v1598, %v1596
        %v1607 = vpack.c.b16 %v1599, %v1597
        %v1617 = vsel %vm829, %v1575, 0
        %1619 = vmatprep.subr.bf16.mxu0 %v1601
        %1620 = vmatpush1.bf16.msra.mxu0 %v1600
        %1621 = vmatprep.subr.bf16.mxu0 %v1603
        %1622 = vmatpush1.bf16.msra.mxu0 %v1602
        %1623 = vmatprep.subr.bf16.mxu0 %v1605
        %1624 = vmatpush1.bf16.msra.mxu0 %v1604
        %1625 = vmatprep.subr.bf16.mxu0 %v1607
        %1626 = vmatpush1.bf16.msra.mxu0 %v1606
        %1627 = vmatprep.subr.bf16.mxu0 0
        %1628 = vmatpush1.bf16.msra.mxu0 0
        %1629 = vmatprep.subr.bf16.mxu0 0
        %1630 = vmatpush1.bf16.msra.mxu0 0
        %1631 = vmatprep.subr.bf16.mxu0 0
        %1632 = vmatpush1.bf16.msra.mxu0 0
        %1633 = vmatprep.subr.bf16.mxu0 0
        %1634 = vmatpush1.bf16.msra.mxu0 0
        %1635 = vmatprep.subr.bf16.mxu0 0
        %1636 = vmatpush1.bf16.msra.mxu0 0
        %1637 = vmatprep.subr.bf16.mxu0 0
        %1638 = vmatpush1.bf16.msra.mxu0 0
        %1639 = vmatprep.subr.bf16.mxu0 0
        %1640 = vmatpush1.bf16.msra.mxu0 0
        %1641 = vmatprep.subr.bf16.mxu0 0
        %1642 = vmatpush1.bf16.msra.mxu0 0
        %1643 = vmatprep.subr.bf16.mxu0 0
        %1644 = vmatpush1.bf16.msra.mxu0 0
        %1645 = vmatprep.subr.bf16.mxu0 0
        %1646 = vmatpush1.bf16.msra.mxu0 0
        %1647 = vmatprep.subr.bf16.mxu0 0
        %1648 = vmatpush1.bf16.msra.mxu0 0
        %1649 = vmatprep.subr.bf16.mxu0 0
        %1650 = vmatpush1.bf16.msra.mxu0 0
        %1651 = vmatprep.mubr.bf16.mxu0 0
        %1652 = vmatmul.mubr.bf16.gmra.mrb[0].mxu0 %v1617
        %v1653 = vpop.f32.mrb[0].mxu0
        %v1654 = vadd.f32 0.0, %v1653
        %v1655 = vpop.f32.mrb[0].mxu0
        %v1656 = vadd.f32 0.0, %v1655
        %v1657 = vpop.f32.mrb[0].mxu0
        %v1658 = vpop.f32.mrb[0].mxu0
        %1659 = vdwg.mxu0
        %v1662 = vcombine.low %v1654, %v1656
        %v1664 = vunpack.c.l.s4 1966171168
        %v1665 = vunpack.c.0.s8 %v1664
        %v1666 = vlaneseq
        %v1667 = vshrl.u32 %v1666, 7
        %v1668 = vsub.s32 %v1665, %v1667
        %v1669 = vrot.slane %v1662, %v1668
        %v1671 = vunpack.c.l.s4 1966171168
        %v1672 = vunpack.c.0.s8 %v1671
        %v1673 = vlaneseq
        %v1674 = vshrl.u32 %v1673, 7
        %v1675 = vsub.s32 %v1672, %v1674
        %v1676 = vrot.slane %v1669, %v1675
        %v1678 = vadd.f32 %v1566, %v1676
        %v1679 = vmax.f32 %v1678, 0.0
        %v1681 = vlaneseq
        %v1682 = vshrl.u32 %v1681, 7
        %v1683 = vsub.s32 0, %v1682
        %v1684 = vrot.slane %v1679, %v1683
        %v1685 = vlaneseq
        %v1686 = vshrl.u32 %v1685, 7
        %v1687 = vsub.s32 1, %v1686
        %v1688 = vrot.slane %v1679, %v1687
        %v1691 = vpack.c.bf16 %v1684, %v1684
        %v1692 = vpack.c.bf16 %v1688, %v1688
        %v1693 = vld [vmem:[%s5] sm:$0xff]
        %v1694 = vld [vmem:[%s5 + $0x8] sm:$0xff]
        %v1695 = vld [vmem:[%s5 + $0x10] sm:$0xff]
        %v1696 = vld [vmem:[%s5 + $0x18] sm:$0xff]
        %v1697 = vld [vmem:[%s5 + $0x20] sm:$0xff]
        %v1698 = vld [vmem:[%s5 + $0x28] sm:$0xff]
        %v1699 = vld [vmem:[%s5 + $0x30] sm:$0xff]
        %v1700 = vld [vmem:[%s5 + $0x38] sm:$0xff]
        %v1701 = vld [vmem:[%s5 + $0x40] sm:$0xff]
        %v1702 = vld [vmem:[%s5 + $0x48] sm:$0xff]
        %v1703 = vld [vmem:[%s5 + $0x50] sm:$0xff]
        %v1704 = vld [vmem:[%s5 + $0x58] sm:$0xff]
        %v1705 = vld [vmem:[%s5 + $0x60] sm:$0xff]
        %v1706 = vld [vmem:[%s5 + $0x68] sm:$0xff]
        %v1707 = vld [vmem:[%s5 + $0x70] sm:$0xff]
        %v1708 = vld [vmem:[%s5 + $0x78] sm:$0xff]
        %v1709 = vld [vmem:[%s5 + $0x80] sm:$0xff]
        %v1710 = vld [vmem:[%s5 + $0x88] sm:$0xff]
        %v1711 = vld [vmem:[%s5 + $0x90] sm:$0xff]
        %v1712 = vld [vmem:[%s5 + $0x98] sm:$0xff]
        %v1713 = vld [vmem:[%s5 + $0xa0] sm:$0xff]
        %v1714 = vld [vmem:[%s5 + $0xa8] sm:$0xff]
        %v1715 = vld [vmem:[%s5 + $0xb0] sm:$0xff]
        %v1716 = vld [vmem:[%s5 + $0xb8] sm:$0xff]
        %v1717 = vld [vmem:[%s5 + $0xc0] sm:$0xff]
        %v1718 = vld [vmem:[%s5 + $0xc8] sm:$0xff]
        %v1719 = vld [vmem:[%s5 + $0xd0] sm:$0xff]
        %v1720 = vld [vmem:[%s5 + $0xd8] sm:$0xff]
        %v1721 = vld [vmem:[%s5 + $0xe0] sm:$0xff]
        %v1722 = vld [vmem:[%s5 + $0xe8] sm:$0xff]
        %v1723 = vld [vmem:[%s5 + $0xf0] sm:$0xff]
        %v1724 = vld [vmem:[%s5 + $0xf8] sm:$0xff]
        %v1725 = vld [vmem:[%s5 + $0x100] sm:$0xff]
        %v1726 = vld [vmem:[%s5 + $0x108] sm:$0xff]
        %v1727 = vld [vmem:[%s5 + $0x110] sm:$0xff]
        %v1728 = vld [vmem:[%s5 + $0x118] sm:$0xff]
        %v1729 = vld [vmem:[%s5 + $0x120] sm:$0xff]
        %v1730 = vld [vmem:[%s5 + $0x128] sm:$0xff]
        %v1731 = vld [vmem:[%s5 + $0x130] sm:$0xff]
        %v1732 = vld [vmem:[%s5 + $0x138] sm:$0xff]
        %v1733 = vld [vmem:[%s5 + $0x140] sm:$0xff]
        %v1734 = vld [vmem:[%s5 + $0x148] sm:$0xff]
        %v1735 = vld [vmem:[%s5 + $0x150] sm:$0xff]
        %v1736 = vld [vmem:[%s5 + $0x158] sm:$0xff]
        %v1737 = vld [vmem:[%s5 + $0x160] sm:$0xff]
        %v1738 = vld [vmem:[%s5 + $0x168] sm:$0xff]
        %v1739 = vld [vmem:[%s5 + $0x170] sm:$0xff]
        %v1740 = vld [vmem:[%s5 + $0x178] sm:$0xff]
        %v1741 = vld [vmem:[%s5 + $0x180] sm:$0xff]
        %v1742 = vld [vmem:[%s5 + $0x188] sm:$0xff]
        %v1743 = vld [vmem:[%s5 + $0x190] sm:$0xff]
        %v1744 = vld [vmem:[%s5 + $0x198] sm:$0xff]
        %v1745 = vld [vmem:[%s5 + $0x1a0] sm:$0xff]
        %v1746 = vld [vmem:[%s5 + $0x1a8] sm:$0xff]
        %v1747 = vld [vmem:[%s5 + $0x1b0] sm:$0xff]
        %v1748 = vld [vmem:[%s5 + $0x1b8] sm:$0xff]
        %v1749 = vld [vmem:[%s5 + $0x1c0] sm:$0xff]
        %v1750 = vld [vmem:[%s5 + $0x1c8] sm:$0xff]
        %v1751 = vld [vmem:[%s5 + $0x1d0] sm:$0xff]
        %v1752 = vld [vmem:[%s5 + $0x1d8] sm:$0xff]
        %v1753 = vld [vmem:[%s5 + $0x1e0] sm:$0xff]
        %v1754 = vld [vmem:[%s5 + $0x1e8] sm:$0xff]
        %v1755 = vld [vmem:[%s5 + $0x1f0] sm:$0xff]
        %v1756 = vld [vmem:[%s5 + $0x1f8] sm:$0xff]
        %v1757 = vld [vmem:[%s5 + $0x200] sm:$0xff]
        %v1758 = vld [vmem:[%s5 + $0x208] sm:$0xff]
        %v1759 = vld [vmem:[%s5 + $0x210] sm:$0xff]
        %v1760 = vld [vmem:[%s5 + $0x218] sm:$0xff]
        %v1761 = vld [vmem:[%s5 + $0x220] sm:$0xff]
        %v1762 = vld [vmem:[%s5 + $0x228] sm:$0xff]
        %v1763 = vld [vmem:[%s5 + $0x230] sm:$0xff]
        %v1764 = vld [vmem:[%s5 + $0x238] sm:$0xff]
        %v1765 = vld [vmem:[%s5 + $0x240] sm:$0xff]
        %v1766 = vld [vmem:[%s5 + $0x248] sm:$0xff]
        %v1767 = vld [vmem:[%s5 + $0x250] sm:$0xff]
        %v1768 = vld [vmem:[%s5 + $0x258] sm:$0xff]
        %v1769 = vld [vmem:[%s5 + $0x260] sm:$0xff]
        %v1770 = vld [vmem:[%s5 + $0x268] sm:$0xff]
        %v1771 = vld [vmem:[%s5 + $0x270] sm:$0xff]
        %v1772 = vld [vmem:[%s5 + $0x278] sm:$0xff]
        %v1773 = vld [vmem:[%s5 + $0x280] sm:$0xff]
        %v1774 = vld [vmem:[%s5 + $0x288] sm:$0xff]
        %v1775 = vld [vmem:[%s5 + $0x290] sm:$0xff]
        %v1776 = vld [vmem:[%s5 + $0x298] sm:$0xff]
        %v1777 = vld [vmem:[%s5 + $0x2a0] sm:$0xff]
        %v1778 = vld [vmem:[%s5 + $0x2a8] sm:$0xff]
        %v1779 = vld [vmem:[%s5 + $0x2b0] sm:$0xff]
        %v1780 = vld [vmem:[%s5 + $0x2b8] sm:$0xff]
        %v1781 = vld [vmem:[%s5 + $0x2c0] sm:$0xff]
        %v1782 = vld [vmem:[%s5 + $0x2c8] sm:$0xff]
        %v1783 = vld [vmem:[%s5 + $0x2d0] sm:$0xff]
        %v1784 = vld [vmem:[%s5 + $0x2d8] sm:$0xff]
        %v1785 = vld [vmem:[%s5 + $0x2e0] sm:$0xff]
        %v1786 = vld [vmem:[%s5 + $0x2e8] sm:$0xff]
        %v1787 = vld [vmem:[%s5 + $0x2f0] sm:$0xff]
        %v1788 = vld [vmem:[%s5 + $0x2f8] sm:$0xff]
        %v1789 = vld [vmem:[%s5 + $0x300] sm:$0xff]
        %v1790 = vld [vmem:[%s5 + $0x308] sm:$0xff]
        %v1791 = vld [vmem:[%s5 + $0x310] sm:$0xff]
        %v1792 = vld [vmem:[%s5 + $0x318] sm:$0xff]
        %v1793 = vld [vmem:[%s5 + $0x320] sm:$0xff]
        %v1794 = vld [vmem:[%s5 + $0x328] sm:$0xff]
        %v1795 = vld [vmem:[%s5 + $0x330] sm:$0xff]
        %v1796 = vld [vmem:[%s5 + $0x338] sm:$0xff]
        %v1797 = vld [vmem:[%s5 + $0x340] sm:$0xff]
        %v1798 = vld [vmem:[%s5 + $0x348] sm:$0xff]
        %v1799 = vld [vmem:[%s5 + $0x350] sm:$0xff]
        %v1800 = vld [vmem:[%s5 + $0x358] sm:$0xff]
        %v1801 = vld [vmem:[%s5 + $0x360] sm:$0xff]
        %v1802 = vld [vmem:[%s5 + $0x368] sm:$0xff]
        %v1803 = vld [vmem:[%s5 + $0x370] sm:$0xff]
        %v1804 = vld [vmem:[%s5 + $0x378] sm:$0xff]
        %v1805 = vld [vmem:[%s5 + $0x380] sm:$0xff]
        %v1806 = vld [vmem:[%s5 + $0x388] sm:$0xff]
        %v1807 = vld [vmem:[%s5 + $0x390] sm:$0xff]
        %v1808 = vld [vmem:[%s5 + $0x398] sm:$0xff]
        %v1809 = vld [vmem:[%s5 + $0x3a0] sm:$0xff]
        %v1810 = vld [vmem:[%s5 + $0x3a8] sm:$0xff]
        %v1811 = vld [vmem:[%s5 + $0x3b0] sm:$0xff]
        %v1812 = vld [vmem:[%s5 + $0x3b8] sm:$0xff]
        %v1813 = vld [vmem:[%s5 + $0x3c0] sm:$0xff]
        %v1814 = vld [vmem:[%s5 + $0x3c8] sm:$0xff]
        %v1815 = vld [vmem:[%s5 + $0x3d0] sm:$0xff]
        %v1816 = vld [vmem:[%s5 + $0x3d8] sm:$0xff]
        %v1817 = vld [vmem:[%s5 + $0x3e0] sm:$0xff]
        %v1818 = vld [vmem:[%s5 + $0x3e8] sm:$0xff]
        %v1819 = vld [vmem:[%s5 + $0x3f0] sm:$0xff]
        %v1820 = vld [vmem:[%s5 + $0x3f8] sm:$0xff]
        %v1821 = vld [vmem:[%s6] sm:$0xff]
        %v1950 = vunpack.c.l.b16 %v1693
        %v1951 = vunpack.c.h.b16 %v1693
        %v1952 = vunpack.c.l.b16 %v1694
        %v1953 = vunpack.c.h.b16 %v1694
        %v1954 = vunpack.c.l.b16 %v1695
        %v1955 = vunpack.c.h.b16 %v1695
        %v1956 = vunpack.c.l.b16 %v1696
        %v1957 = vunpack.c.h.b16 %v1696
        %v1958 = vunpack.c.l.b16 %v1697
        %v1959 = vunpack.c.h.b16 %v1697
        %v1960 = vunpack.c.l.b16 %v1698
        %v1961 = vunpack.c.h.b16 %v1698
        %v1962 = vunpack.c.l.b16 %v1699
        %v1963 = vunpack.c.h.b16 %v1699
        %v1964 = vunpack.c.l.b16 %v1700
        %v1965 = vunpack.c.h.b16 %v1700
        %v1966 = vunpack.c.l.b16 %v1701
        %v1967 = vunpack.c.h.b16 %v1701
        %v1968 = vunpack.c.l.b16 %v1702
        %v1969 = vunpack.c.h.b16 %v1702
        %v1970 = vunpack.c.l.b16 %v1703
        %v1971 = vunpack.c.h.b16 %v1703
        %v1972 = vunpack.c.l.b16 %v1704
        %v1973 = vunpack.c.h.b16 %v1704
        %v1974 = vunpack.c.l.b16 %v1705
        %v1975 = vunpack.c.h.b16 %v1705
        %v1976 = vunpack.c.l.b16 %v1706
        %v1977 = vunpack.c.h.b16 %v1706
        %v1978 = vunpack.c.l.b16 %v1707
        %v1979 = vunpack.c.h.b16 %v1707
        %v1980 = vunpack.c.l.b16 %v1708
        %v1981 = vunpack.c.h.b16 %v1708
        %v1982 = vunpack.c.l.b16 %v1709
        %v1983 = vunpack.c.h.b16 %v1709
        %v1984 = vunpack.c.l.b16 %v1710
        %v1985 = vunpack.c.h.b16 %v1710
        %v1986 = vunpack.c.l.b16 %v1711
        %v1987 = vunpack.c.h.b16 %v1711
        %v1988 = vunpack.c.l.b16 %v1712
        %v1989 = vunpack.c.h.b16 %v1712
        %v1990 = vunpack.c.l.b16 %v1713
        %v1991 = vunpack.c.h.b16 %v1713
        %v1992 = vunpack.c.l.b16 %v1714
        %v1993 = vunpack.c.h.b16 %v1714
        %v1994 = vunpack.c.l.b16 %v1715
        %v1995 = vunpack.c.h.b16 %v1715
        %v1996 = vunpack.c.l.b16 %v1716
        %v1997 = vunpack.c.h.b16 %v1716
        %v1998 = vunpack.c.l.b16 %v1717
        %v1999 = vunpack.c.h.b16 %v1717
        %v2000 = vunpack.c.l.b16 %v1718
        %v2001 = vunpack.c.h.b16 %v1718
        %v2002 = vunpack.c.l.b16 %v1719
        %v2003 = vunpack.c.h.b16 %v1719
        %v2004 = vunpack.c.l.b16 %v1720
        %v2005 = vunpack.c.h.b16 %v1720
        %v2006 = vunpack.c.l.b16 %v1721
        %v2007 = vunpack.c.h.b16 %v1721
        %v2008 = vunpack.c.l.b16 %v1722
        %v2009 = vunpack.c.h.b16 %v1722
        %v2010 = vunpack.c.l.b16 %v1723
        %v2011 = vunpack.c.h.b16 %v1723
        %v2012 = vunpack.c.l.b16 %v1724
        %v2013 = vunpack.c.h.b16 %v1724
        %v2014 = vunpack.c.l.b16 %v1725
        %v2015 = vunpack.c.h.b16 %v1725
        %v2016 = vunpack.c.l.b16 %v1726
        %v2017 = vunpack.c.h.b16 %v1726
        %v2018 = vunpack.c.l.b16 %v1727
        %v2019 = vunpack.c.h.b16 %v1727
        %v2020 = vunpack.c.l.b16 %v1728
        %v2021 = vunpack.c.h.b16 %v1728
        %v2022 = vunpack.c.l.b16 %v1729
        %v2023 = vunpack.c.h.b16 %v1729
        %v2024 = vunpack.c.l.b16 %v1730
        %v2025 = vunpack.c.h.b16 %v1730
        %v2026 = vunpack.c.l.b16 %v1731
        %v2027 = vunpack.c.h.b16 %v1731
        %v2028 = vunpack.c.l.b16 %v1732
        %v2029 = vunpack.c.h.b16 %v1732
        %v2030 = vunpack.c.l.b16 %v1733
        %v2031 = vunpack.c.h.b16 %v1733
        %v2032 = vunpack.c.l.b16 %v1734
        %v2033 = vunpack.c.h.b16 %v1734
        %v2034 = vunpack.c.l.b16 %v1735
        %v2035 = vunpack.c.h.b16 %v1735
        %v2036 = vunpack.c.l.b16 %v1736
        %v2037 = vunpack.c.h.b16 %v1736
        %v2038 = vunpack.c.l.b16 %v1737
        %v2039 = vunpack.c.h.b16 %v1737
        %v2040 = vunpack.c.l.b16 %v1738
        %v2041 = vunpack.c.h.b16 %v1738
        %v2042 = vunpack.c.l.b16 %v1739
        %v2043 = vunpack.c.h.b16 %v1739
        %v2044 = vunpack.c.l.b16 %v1740
        %v2045 = vunpack.c.h.b16 %v1740
        %v2046 = vunpack.c.l.b16 %v1741
        %v2047 = vunpack.c.h.b16 %v1741
        %v2048 = vunpack.c.l.b16 %v1742
        %v2049 = vunpack.c.h.b16 %v1742
        %v2050 = vunpack.c.l.b16 %v1743
        %v2051 = vunpack.c.h.b16 %v1743
        %v2052 = vunpack.c.l.b16 %v1744
        %v2053 = vunpack.c.h.b16 %v1744
        %v2054 = vunpack.c.l.b16 %v1745
        %v2055 = vunpack.c.h.b16 %v1745
        %v2056 = vunpack.c.l.b16 %v1746
        %v2057 = vunpack.c.h.b16 %v1746
        %v2058 = vunpack.c.l.b16 %v1747
        %v2059 = vunpack.c.h.b16 %v1747
        %v2060 = vunpack.c.l.b16 %v1748
        %v2061 = vunpack.c.h.b16 %v1748
        %v2062 = vunpack.c.l.b16 %v1749
        %v2063 = vunpack.c.h.b16 %v1749
        %v2064 = vunpack.c.l.b16 %v1750
        %v2065 = vunpack.c.h.b16 %v1750
        %v2066 = vunpack.c.l.b16 %v1751
        %v2067 = vunpack.c.h.b16 %v1751
        %v2068 = vunpack.c.l.b16 %v1752
        %v2069 = vunpack.c.h.b16 %v1752
        %v2070 = vunpack.c.l.b16 %v1753
        %v2071 = vunpack.c.h.b16 %v1753
        %v2072 = vunpack.c.l.b16 %v1754
        %v2073 = vunpack.c.h.b16 %v1754
        %v2074 = vunpack.c.l.b16 %v1755
        %v2075 = vunpack.c.h.b16 %v1755
        %v2076 = vunpack.c.l.b16 %v1756
        %v2077 = vunpack.c.h.b16 %v1756
        %v2078 = vunpack.c.l.b16 %v1757
        %v2079 = vunpack.c.h.b16 %v1757
        %v2080 = vunpack.c.l.b16 %v1758
        %v2081 = vunpack.c.h.b16 %v1758
        %v2082 = vunpack.c.l.b16 %v1759
        %v2083 = vunpack.c.h.b16 %v1759
        %v2084 = vunpack.c.l.b16 %v1760
        %v2085 = vunpack.c.h.b16 %v1760
        %v2086 = vunpack.c.l.b16 %v1761
        %v2087 = vunpack.c.h.b16 %v1761
        %v2088 = vunpack.c.l.b16 %v1762
        %v2089 = vunpack.c.h.b16 %v1762
        %v2090 = vunpack.c.l.b16 %v1763
        %v2091 = vunpack.c.h.b16 %v1763
        %v2092 = vunpack.c.l.b16 %v1764
        %v2093 = vunpack.c.h.b16 %v1764
        %v2094 = vunpack.c.l.b16 %v1765
        %v2095 = vunpack.c.h.b16 %v1765
        %v2096 = vunpack.c.l.b16 %v1766
        %v2097 = vunpack.c.h.b16 %v1766
        %v2098 = vunpack.c.l.b16 %v1767
        %v2099 = vunpack.c.h.b16 %v1767
        %v2100 = vunpack.c.l.b16 %v1768
        %v2101 = vunpack.c.h.b16 %v1768
        %v2102 = vunpack.c.l.b16 %v1769
        %v2103 = vunpack.c.h.b16 %v1769
        %v2104 = vunpack.c.l.b16 %v1770
        %v2105 = vunpack.c.h.b16 %v1770
        %v2106 = vunpack.c.l.b16 %v1771
        %v2107 = vunpack.c.h.b16 %v1771
        %v2108 = vunpack.c.l.b16 %v1772
        %v2109 = vunpack.c.h.b16 %v1772
        %v2110 = vunpack.c.l.b16 %v1773
        %v2111 = vunpack.c.h.b16 %v1773
        %v2112 = vunpack.c.l.b16 %v1774
        %v2113 = vunpack.c.h.b16 %v1774
        %v2114 = vunpack.c.l.b16 %v1775
        %v2115 = vunpack.c.h.b16 %v1775
        %v2116 = vunpack.c.l.b16 %v1776
        %v2117 = vunpack.c.h.b16 %v1776
        %v2118 = vunpack.c.l.b16 %v1777
        %v2119 = vunpack.c.h.b16 %v1777
        %v2120 = vunpack.c.l.b16 %v1778
        %v2121 = vunpack.c.h.b16 %v1778
        %v2122 = vunpack.c.l.b16 %v1779
        %v2123 = vunpack.c.h.b16 %v1779
        %v2124 = vunpack.c.l.b16 %v1780
        %v2125 = vunpack.c.h.b16 %v1780
        %v2126 = vunpack.c.l.b16 %v1781
        %v2127 = vunpack.c.h.b16 %v1781
        %v2128 = vunpack.c.l.b16 %v1782
        %v2129 = vunpack.c.h.b16 %v1782
        %v2130 = vunpack.c.l.b16 %v1783
        %v2131 = vunpack.c.h.b16 %v1783
        %v2132 = vunpack.c.l.b16 %v1784
        %v2133 = vunpack.c.h.b16 %v1784
        %v2134 = vunpack.c.l.b16 %v1785
        %v2135 = vunpack.c.h.b16 %v1785
        %v2136 = vunpack.c.l.b16 %v1786
        %v2137 = vunpack.c.h.b16 %v1786
        %v2138 = vunpack.c.l.b16 %v1787
        %v2139 = vunpack.c.h.b16 %v1787
        %v2140 = vunpack.c.l.b16 %v1788
        %v2141 = vunpack.c.h.b16 %v1788
        %v2142 = vunpack.c.l.b16 %v1789
        %v2143 = vunpack.c.h.b16 %v1789
        %v2144 = vunpack.c.l.b16 %v1790
        %v2145 = vunpack.c.h.b16 %v1790
        %v2146 = vunpack.c.l.b16 %v1791
        %v2147 = vunpack.c.h.b16 %v1791
        %v2148 = vunpack.c.l.b16 %v1792
        %v2149 = vunpack.c.h.b16 %v1792
        %v2150 = vunpack.c.l.b16 %v1793
        %v2151 = vunpack.c.h.b16 %v1793
        %v2152 = vunpack.c.l.b16 %v1794
        %v2153 = vunpack.c.h.b16 %v1794
        %v2154 = vunpack.c.l.b16 %v1795
        %v2155 = vunpack.c.h.b16 %v1795
        %v2156 = vunpack.c.l.b16 %v1796
        %v2157 = vunpack.c.h.b16 %v1796
        %v2158 = vunpack.c.l.b16 %v1797
        %v2159 = vunpack.c.h.b16 %v1797
        %v2160 = vunpack.c.l.b16 %v1798
        %v2161 = vunpack.c.h.b16 %v1798
        %v2162 = vunpack.c.l.b16 %v1799
        %v2163 = vunpack.c.h.b16 %v1799
        %v2164 = vunpack.c.l.b16 %v1800
        %v2165 = vunpack.c.h.b16 %v1800
        %v2166 = vunpack.c.l.b16 %v1801
        %v2167 = vunpack.c.h.b16 %v1801
        %v2168 = vunpack.c.l.b16 %v1802
        %v2169 = vunpack.c.h.b16 %v1802
        %v2170 = vunpack.c.l.b16 %v1803
        %v2171 = vunpack.c.h.b16 %v1803
        %v2172 = vunpack.c.l.b16 %v1804
        %v2173 = vunpack.c.h.b16 %v1804
        %v2174 = vunpack.c.l.b16 %v1805
        %v2175 = vunpack.c.h.b16 %v1805
        %v2176 = vunpack.c.l.b16 %v1806
        %v2177 = vunpack.c.h.b16 %v1806
        %v2178 = vunpack.c.l.b16 %v1807
        %v2179 = vunpack.c.h.b16 %v1807
        %v2180 = vunpack.c.l.b16 %v1808
        %v2181 = vunpack.c.h.b16 %v1808
        %v2182 = vunpack.c.l.b16 %v1809
        %v2183 = vunpack.c.h.b16 %v1809
        %v2184 = vunpack.c.l.b16 %v1810
        %v2185 = vunpack.c.h.b16 %v1810
        %v2186 = vunpack.c.l.b16 %v1811
        %v2187 = vunpack.c.h.b16 %v1811
        %v2188 = vunpack.c.l.b16 %v1812
        %v2189 = vunpack.c.h.b16 %v1812
        %v2190 = vunpack.c.l.b16 %v1813
        %v2191 = vunpack.c.h.b16 %v1813
        %v2192 = vunpack.c.l.b16 %v1814
        %v2193 = vunpack.c.h.b16 %v1814
        %v2194 = vunpack.c.l.b16 %v1815
        %v2195 = vunpack.c.h.b16 %v1815
        %v2196 = vunpack.c.l.b16 %v1816
        %v2197 = vunpack.c.h.b16 %v1816
        %v2198 = vunpack.c.l.b16 %v1817
        %v2199 = vunpack.c.h.b16 %v1817
        %v2200 = vunpack.c.l.b16 %v1818
        %v2201 = vunpack.c.h.b16 %v1818
        %v2202 = vunpack.c.l.b16 %v1819
        %v2203 = vunpack.c.h.b16 %v1819
        %v2204 = vunpack.c.l.b16 %v1820
        %v2205 = vunpack.c.h.b16 %v1820
        %v2206 = vpack.c.b16 %v1958, %v1950
        %v2207 = vpack.c.b16 %v1959, %v1951
        %v2208 = vpack.c.b16 %v1960, %v1952
        %v2209 = vpack.c.b16 %v1961, %v1953
        %v2210 = vpack.c.b16 %v1962, %v1954
        %v2211 = vpack.c.b16 %v1963, %v1955
        %v2212 = vpack.c.b16 %v1964, %v1956
        %v2213 = vpack.c.b16 %v1965, %v1957
        %v2214 = vpack.c.b16 %v1974, %v1966
        %v2215 = vpack.c.b16 %v1975, %v1967
        %v2216 = vpack.c.b16 %v1976, %v1968
        %v2217 = vpack.c.b16 %v1977, %v1969
        %v2218 = vpack.c.b16 %v1978, %v1970
        %v2219 = vpack.c.b16 %v1979, %v1971
        %v2220 = vpack.c.b16 %v1980, %v1972
        %v2221 = vpack.c.b16 %v1981, %v1973
        %v2222 = vpack.c.b16 %v1990, %v1982
        %v2223 = vpack.c.b16 %v1991, %v1983
        %v2224 = vpack.c.b16 %v1992, %v1984
        %v2225 = vpack.c.b16 %v1993, %v1985
        %v2226 = vpack.c.b16 %v1994, %v1986
        %v2227 = vpack.c.b16 %v1995, %v1987
        %v2228 = vpack.c.b16 %v1996, %v1988
        %v2229 = vpack.c.b16 %v1997, %v1989
        %v2230 = vpack.c.b16 %v2006, %v1998
        %v2231 = vpack.c.b16 %v2007, %v1999
        %v2232 = vpack.c.b16 %v2008, %v2000
        %v2233 = vpack.c.b16 %v2009, %v2001
        %v2234 = vpack.c.b16 %v2010, %v2002
        %v2235 = vpack.c.b16 %v2011, %v2003
        %v2236 = vpack.c.b16 %v2012, %v2004
        %v2237 = vpack.c.b16 %v2013, %v2005
        %v2238 = vpack.c.b16 %v2022, %v2014
        %v2239 = vpack.c.b16 %v2023, %v2015
        %v2240 = vpack.c.b16 %v2024, %v2016
        %v2241 = vpack.c.b16 %v2025, %v2017
        %v2242 = vpack.c.b16 %v2026, %v2018
        %v2243 = vpack.c.b16 %v2027, %v2019
        %v2244 = vpack.c.b16 %v2028, %v2020
        %v2245 = vpack.c.b16 %v2029, %v2021
        %v2246 = vpack.c.b16 %v2038, %v2030
        %v2247 = vpack.c.b16 %v2039, %v2031
        %v2248 = vpack.c.b16 %v2040, %v2032
        %v2249 = vpack.c.b16 %v2041, %v2033
        %v2250 = vpack.c.b16 %v2042, %v2034
        %v2251 = vpack.c.b16 %v2043, %v2035
        %v2252 = vpack.c.b16 %v2044, %v2036
        %v2253 = vpack.c.b16 %v2045, %v2037
        %v2254 = vpack.c.b16 %v2054, %v2046
        %v2255 = vpack.c.b16 %v2055, %v2047
        %v2256 = vpack.c.b16 %v2056, %v2048
        %v2257 = vpack.c.b16 %v2057, %v2049
        %v2258 = vpack.c.b16 %v2058, %v2050
        %v2259 = vpack.c.b16 %v2059, %v2051
        %v2260 = vpack.c.b16 %v2060, %v2052
        %v2261 = vpack.c.b16 %v2061, %v2053
        %v2262 = vpack.c.b16 %v2070, %v2062
        %v2263 = vpack.c.b16 %v2071, %v2063
        %v2264 = vpack.c.b16 %v2072, %v2064
        %v2265 = vpack.c.b16 %v2073, %v2065
        %v2266 = vpack.c.b16 %v2074, %v2066
        %v2267 = vpack.c.b16 %v2075, %v2067
        %v2268 = vpack.c.b16 %v2076, %v2068
        %v2269 = vpack.c.b16 %v2077, %v2069
        %v2270 = vpack.c.b16 %v2086, %v2078
        %v2271 = vpack.c.b16 %v2087, %v2079
        %v2272 = vpack.c.b16 %v2088, %v2080
        %v2273 = vpack.c.b16 %v2089, %v2081
        %v2274 = vpack.c.b16 %v2090, %v2082
        %v2275 = vpack.c.b16 %v2091, %v2083
        %v2276 = vpack.c.b16 %v2092, %v2084
        %v2277 = vpack.c.b16 %v2093, %v2085
        %v2278 = vpack.c.b16 %v2102, %v2094
        %v2279 = vpack.c.b16 %v2103, %v2095
        %v2280 = vpack.c.b16 %v2104, %v2096
        %v2281 = vpack.c.b16 %v2105, %v2097
        %v2282 = vpack.c.b16 %v2106, %v2098
        %v2283 = vpack.c.b16 %v2107, %v2099
        %v2284 = vpack.c.b16 %v2108, %v2100
        %v2285 = vpack.c.b16 %v2109, %v2101
        %v2286 = vpack.c.b16 %v2118, %v2110
        %v2287 = vpack.c.b16 %v2119, %v2111
        %v2288 = vpack.c.b16 %v2120, %v2112
        %v2289 = vpack.c.b16 %v2121, %v2113
        %v2290 = vpack.c.b16 %v2122, %v2114
        %v2291 = vpack.c.b16 %v2123, %v2115
        %v2292 = vpack.c.b16 %v2124, %v2116
        %v2293 = vpack.c.b16 %v2125, %v2117
        %v2294 = vpack.c.b16 %v2134, %v2126
        %v2295 = vpack.c.b16 %v2135, %v2127
        %v2296 = vpack.c.b16 %v2136, %v2128
        %v2297 = vpack.c.b16 %v2137, %v2129
        %v2298 = vpack.c.b16 %v2138, %v2130
        %v2299 = vpack.c.b16 %v2139, %v2131
        %v2300 = vpack.c.b16 %v2140, %v2132
        %v2301 = vpack.c.b16 %v2141, %v2133
        %v2302 = vpack.c.b16 %v2150, %v2142
        %v2303 = vpack.c.b16 %v2151, %v2143
        %v2304 = vpack.c.b16 %v2152, %v2144
        %v2305 = vpack.c.b16 %v2153, %v2145
        %v2306 = vpack.c.b16 %v2154, %v2146
        %v2307 = vpack.c.b16 %v2155, %v2147
        %v2308 = vpack.c.b16 %v2156, %v2148
        %v2309 = vpack.c.b16 %v2157, %v2149
        %v2310 = vpack.c.b16 %v2166, %v2158
        %v2311 = vpack.c.b16 %v2167, %v2159
        %v2312 = vpack.c.b16 %v2168, %v2160
        %v2313 = vpack.c.b16 %v2169, %v2161
        %v2314 = vpack.c.b16 %v2170, %v2162
        %v2315 = vpack.c.b16 %v2171, %v2163
        %v2316 = vpack.c.b16 %v2172, %v2164
        %v2317 = vpack.c.b16 %v2173, %v2165
        %v2318 = vpack.c.b16 %v2182, %v2174
        %v2319 = vpack.c.b16 %v2183, %v2175
        %v2320 = vpack.c.b16 %v2184, %v2176
        %v2321 = vpack.c.b16 %v2185, %v2177
        %v2322 = vpack.c.b16 %v2186, %v2178
        %v2323 = vpack.c.b16 %v2187, %v2179
        %v2324 = vpack.c.b16 %v2188, %v2180
        %v2325 = vpack.c.b16 %v2189, %v2181
        %v2326 = vpack.c.b16 %v2198, %v2190
        %v2327 = vpack.c.b16 %v2199, %v2191
        %v2328 = vpack.c.b16 %v2200, %v2192
        %v2329 = vpack.c.b16 %v2201, %v2193
        %v2330 = vpack.c.b16 %v2202, %v2194
        %v2331 = vpack.c.b16 %v2203, %v2195
        %v2332 = vpack.c.b16 %v2204, %v2196
        %v2333 = vpack.c.b16 %v2205, %v2197
        %v2463 = vlaneseq
        %v2464 = vshrl.u32 %v2463, 7
        %v2465 = vsub.s32 0, %v2464
        %v2466 = vrot.slane %v1821, %v2465
        %v2467 = vlaneseq
        %v2468 = vshrl.u32 %v2467, 7
        %v2469 = vsub.s32 1, %v2468
        %v2470 = vrot.slane %v1821, %v2469
        %v2471 = vlaneseq
        %v2472 = vshrl.u32 %v2471, 7
        %v2473 = vsub.s32 2, %v2472
        %v2474 = vrot.slane %v1821, %v2473
        %v2475 = vlaneseq
        %v2476 = vshrl.u32 %v2475, 7
        %v2477 = vsub.s32 3, %v2476
        %v2478 = vrot.slane %v1821, %v2477
        %v2479 = vlaneseq
        %v2480 = vshrl.u32 %v2479, 7
        %v2481 = vsub.s32 4, %v2480
        %v2482 = vrot.slane %v1821, %v2481
        %v2483 = vlaneseq
        %v2484 = vshrl.u32 %v2483, 7
        %v2485 = vsub.s32 5, %v2484
        %v2486 = vrot.slane %v1821, %v2485
        %v2487 = vlaneseq
        %v2488 = vshrl.u32 %v2487, 7
        %v2489 = vsub.s32 6, %v2488
        %v2490 = vrot.slane %v1821, %v2489
        %v2491 = vlaneseq
        %v2492 = vshrl.u32 %v2491, 7
        %v2493 = vsub.s32 7, %v2492
        %v2494 = vrot.slane %v1821, %v2493
        %2503 = vmatprep.subr.bf16.mxu0 %v2207
        %2504 = vmatpush1.bf16.msra.mxu0 %v2206
        %2505 = vmatprep.subr.bf16.mxu0 %v2215
        %2506 = vmatpush1.bf16.msra.mxu0 %v2214
        %2507 = vmatprep.subr.bf16.mxu0 %v2223
        %2508 = vmatpush1.bf16.msra.mxu0 %v2222
        %2509 = vmatprep.subr.bf16.mxu0 %v2231
        %2510 = vmatpush1.bf16.msra.mxu0 %v2230
        %2511 = vmatprep.subr.bf16.mxu0 %v2239
        %2512 = vmatpush1.bf16.msra.mxu0 %v2238
        %2513 = vmatprep.subr.bf16.mxu0 %v2247
        %2514 = vmatpush1.bf16.msra.mxu0 %v2246
        %2515 = vmatprep.subr.bf16.mxu0 %v2255
        %2516 = vmatpush1.bf16.msra.mxu0 %v2254
        %2517 = vmatprep.subr.bf16.mxu0 %v2263
        %2518 = vmatpush1.bf16.msra.mxu0 %v2262
        %2519 = vmatprep.subr.bf16.mxu0 %v2271
        %2520 = vmatpush1.bf16.msra.mxu0 %v2270
        %2521 = vmatprep.subr.bf16.mxu0 %v2279
        %2522 = vmatpush1.bf16.msra.mxu0 %v2278
        %2523 = vmatprep.subr.bf16.mxu0 %v2287
        %2524 = vmatpush1.bf16.msra.mxu0 %v2286
        %2525 = vmatprep.subr.bf16.mxu0 %v2295
        %2526 = vmatpush1.bf16.msra.mxu0 %v2294
        %2527 = vmatprep.subr.bf16.mxu0 %v2303
        %2528 = vmatpush1.bf16.msra.mxu0 %v2302
        %2529 = vmatprep.subr.bf16.mxu0 %v2311
        %2530 = vmatpush1.bf16.msra.mxu0 %v2310
        %2531 = vmatprep.subr.bf16.mxu0 %v2319
        %2532 = vmatpush1.bf16.msra.mxu0 %v2318
        %2533 = vmatprep.subr.bf16.mxu0 %v2327
        %2534 = vmatpush1.bf16.msra.mxu0 %v2326
        %2535 = vmatprep.mubr.bf16.mxu0 %v1692
        %2536 = vmatmul.mubr.bf16.gmra.mrb[0].mxu0 %v1691
        %v2537 = vpop.f32.mrb[0].mxu0
        %v2538 = vadd.f32 %v2466, %v2537
        %v2539 = vpop.f32.mrb[0].mxu0
        %v2540 = vadd.f32 %v2470, %v2539
        %v2541 = vpop.f32.mrb[0].mxu0
        %v2542 = vpop.f32.mrb[0].mxu0
        %2543 = vdwg.mxu0
        %2544 = vmatprep.subr.bf16.mxu0 %v2209
        %2545 = vmatpush1.bf16.msra.mxu0 %v2208
        %2546 = vmatprep.subr.bf16.mxu0 %v2217
        %2547 = vmatpush1.bf16.msra.mxu0 %v2216
        %2548 = vmatprep.subr.bf16.mxu0 %v2225
        %2549 = vmatpush1.bf16.msra.mxu0 %v2224
        %2550 = vmatprep.subr.bf16.mxu0 %v2233
        %2551 = vmatpush1.bf16.msra.mxu0 %v2232
        %2552 = vmatprep.subr.bf16.mxu0 %v2241
        %2553 = vmatpush1.bf16.msra.mxu0 %v2240
        %2554 = vmatprep.subr.bf16.mxu0 %v2249
        %2555 = vmatpush1.bf16.msra.mxu0 %v2248
        %2556 = vmatprep.subr.bf16.mxu0 %v2257
        %2557 = vmatpush1.bf16.msra.mxu0 %v2256
        %2558 = vmatprep.subr.bf16.mxu0 %v2265
        %2559 = vmatpush1.bf16.msra.mxu0 %v2264
        %2560 = vmatprep.subr.bf16.mxu0 %v2273
        %2561 = vmatpush1.bf16.msra.mxu0 %v2272
        %2562 = vmatprep.subr.bf16.mxu0 %v2281
        %2563 = vmatpush1.bf16.msra.mxu0 %v2280
        %2564 = vmatprep.subr.bf16.mxu0 %v2289
        %2565 = vmatpush1.bf16.msra.mxu0 %v2288
        %2566 = vmatprep.subr.bf16.mxu0 %v2297
        %2567 = vmatpush1.bf16.msra.mxu0 %v2296
        %2568 = vmatprep.subr.bf16.mxu0 %v2305
        %2569 = vmatpush1.bf16.msra.mxu0 %v2304
        %2570 = vmatprep.subr.bf16.mxu0 %v2313
        %2571 = vmatpush1.bf16.msra.mxu0 %v2312
        %2572 = vmatprep.subr.bf16.mxu0 %v2321
        %2573 = vmatpush1.bf16.msra.mxu0 %v2320
        %2574 = vmatprep.subr.bf16.mxu0 %v2329
        %2575 = vmatpush1.bf16.msra.mxu0 %v2328
        %2576 = vmatprep.mubr.bf16.mxu0 %v1692
        %2577 = vmatmul.mubr.bf16.gmra.mrb[0].mxu0 %v1691
        %v2578 = vpop.f32.mrb[0].mxu0
        %v2579 = vadd.f32 %v2474, %v2578
        %v2580 = vpop.f32.mrb[0].mxu0
        %v2581 = vadd.f32 %v2478, %v2580
        %v2582 = vpop.f32.mrb[0].mxu0
        %v2583 = vpop.f32.mrb[0].mxu0
        %2584 = vdwg.mxu0
        %2585 = vmatprep.subr.bf16.mxu0 %v2211
        %2586 = vmatpush1.bf16.msra.mxu0 %v2210
        %2587 = vmatprep.subr.bf16.mxu0 %v2219
        %2588 = vmatpush1.bf16.msra.mxu0 %v2218
        %2589 = vmatprep.subr.bf16.mxu0 %v2227
        %2590 = vmatpush1.bf16.msra.mxu0 %v2226
        %2591 = vmatprep.subr.bf16.mxu0 %v2235
        %2592 = vmatpush1.bf16.msra.mxu0 %v2234
        %2593 = vmatprep.subr.bf16.mxu0 %v2243
        %2594 = vmatpush1.bf16.msra.mxu0 %v2242
        %2595 = vmatprep.subr.bf16.mxu0 %v2251
        %2596 = vmatpush1.bf16.msra.mxu0 %v2250
        %2597 = vmatprep.subr.bf16.mxu0 %v2259
        %2598 = vmatpush1.bf16.msra.mxu0 %v2258
        %2599 = vmatprep.subr.bf16.mxu0 %v2267
        %2600 = vmatpush1.bf16.msra.mxu0 %v2266
        %2601 = vmatprep.subr.bf16.mxu0 %v2275
        %2602 = vmatpush1.bf16.msra.mxu0 %v2274
        %2603 = vmatprep.subr.bf16.mxu0 %v2283
        %2604 = vmatpush1.bf16.msra.mxu0 %v2282
        %2605 = vmatprep.subr.bf16.mxu0 %v2291
        %2606 = vmatpush1.bf16.msra.mxu0 %v2290
        %2607 = vmatprep.subr.bf16.mxu0 %v2299
        %2608 = vmatpush1.bf16.msra.mxu0 %v2298
        %2609 = vmatprep.subr.bf16.mxu0 %v2307
        %2610 = vmatpush1.bf16.msra.mxu0 %v2306
        %2611 = vmatprep.subr.bf16.mxu0 %v2315
        %2612 = vmatpush1.bf16.msra.mxu0 %v2314
        %2613 = vmatprep.subr.bf16.mxu0 %v2323
        %2614 = vmatpush1.bf16.msra.mxu0 %v2322
        %2615 = vmatprep.subr.bf16.mxu0 %v2331
        %2616 = vmatpush1.bf16.msra.mxu0 %v2330
        %2617 = vmatprep.mubr.bf16.mxu0 %v1692
        %2618 = vmatmul.mubr.bf16.gmra.mrb[0].mxu0 %v1691
        %v2619 = vpop.f32.mrb[0].mxu0
        %v2620 = vadd.f32 %v2482, %v2619
        %v2621 = vpop.f32.mrb[0].mxu0
        %v2622 = vadd.f32 %v2486, %v2621
        %v2623 = vpop.f32.mrb[0].mxu0
        %v2624 = vpop.f32.mrb[0].mxu0
        %2625 = vdwg.mxu0
        %2626 = vmatprep.subr.bf16.mxu0 %v2213
        %2627 = vmatpush1.bf16.msra.mxu0 %v2212
        %2628 = vmatprep.subr.bf16.mxu0 %v2221
        %2629 = vmatpush1.bf16.msra.mxu0 %v2220
        %2630 = vmatprep.subr.bf16.mxu0 %v2229
        %2631 = vmatpush1.bf16.msra.mxu0 %v2228
        %2632 = vmatprep.subr.bf16.mxu0 %v2237
        %2633 = vmatpush1.bf16.msra.mxu0 %v2236
        %2634 = vmatprep.subr.bf16.mxu0 %v2245
        %2635 = vmatpush1.bf16.msra.mxu0 %v2244
        %2636 = vmatprep.subr.bf16.mxu0 %v2253
        %2637 = vmatpush1.bf16.msra.mxu0 %v2252
        %2638 = vmatprep.subr.bf16.mxu0 %v2261
        %2639 = vmatpush1.bf16.msra.mxu0 %v2260
        %2640 = vmatprep.subr.bf16.mxu0 %v2269
        %2641 = vmatpush1.bf16.msra.mxu0 %v2268
        %2642 = vmatprep.subr.bf16.mxu0 %v2277
        %2643 = vmatpush1.bf16.msra.mxu0 %v2276
        %2644 = vmatprep.subr.bf16.mxu0 %v2285
        %2645 = vmatpush1.bf16.msra.mxu0 %v2284
        %2646 = vmatprep.subr.bf16.mxu0 %v2293
        %2647 = vmatpush1.bf16.msra.mxu0 %v2292
        %2648 = vmatprep.subr.bf16.mxu0 %v2301
        %2649 = vmatpush1.bf16.msra.mxu0 %v2300
        %2650 = vmatprep.subr.bf16.mxu0 %v2309
        %2651 = vmatpush1.bf16.msra.mxu0 %v2308
        %2652 = vmatprep.subr.bf16.mxu0 %v2317
        %2653 = vmatpush1.bf16.msra.mxu0 %v2316
        %2654 = vmatprep.subr.bf16.mxu0 %v2325
        %2655 = vmatpush1.bf16.msra.mxu0 %v2324
        %2656 = vmatprep.subr.bf16.mxu0 %v2333
        %2657 = vmatpush1.bf16.msra.mxu0 %v2332
        %2658 = vmatprep.mubr.bf16.mxu0 %v1692
        %2659 = vmatmul.mubr.bf16.gmra.mrb[0].mxu0 %v1691
        %v2660 = vpop.f32.mrb[0].mxu0
        %v2661 = vadd.f32 %v2490, %v2660
        %v2662 = vpop.f32.mrb[0].mxu0
        %v2663 = vadd.f32 %v2494, %v2662
        %v2664 = vpop.f32.mrb[0].mxu0
        %v2665 = vpop.f32.mrb[0].mxu0
        %2666 = vdwg.mxu0
        %v2667 = vmax.f32 %v2538, 0.0
        %v2668 = vmax.f32 %v2540, 0.0
        %v2669 = vmax.f32 %v2579, 0.0
        %v2670 = vmax.f32 %v2581, 0.0
        %v2671 = vmax.f32 %v2620, 0.0
        %v2672 = vmax.f32 %v2622, 0.0
        %v2673 = vmax.f32 %v2661, 0.0
        %v2674 = vmax.f32 %v2663, 0.0
        %v2675 = vpack.c.bf16 %v2667, %v2667
        %v2676 = vpack.c.bf16 %v2668, %v2668
        %v2677 = vpack.c.bf16 %v2669, %v2669
        %v2678 = vpack.c.bf16 %v2670, %v2670
        %v2679 = vpack.c.bf16 %v2671, %v2671
        %v2680 = vpack.c.bf16 %v2672, %v2672
        %v2681 = vpack.c.bf16 %v2673, %v2673
        %v2682 = vpack.c.bf16 %v2674, %v2674
        %v2683 = vld [vmem:[%s7] sm:$0xf]
        %v2684 = vld [vmem:[%s7 + $0x4] sm:$0xf]
        %v2685 = vld [vmem:[%s7 + $0x8] sm:$0xf]
        %v2686 = vld [vmem:[%s7 + $0xc] sm:$0xf]
        %v2687 = vld [vmem:[%s7 + $0x10] sm:$0xf]
        %v2688 = vld [vmem:[%s7 + $0x14] sm:$0xf]
        %v2689 = vld [vmem:[%s7 + $0x18] sm:$0xf]
        %v2690 = vld [vmem:[%s7 + $0x1c] sm:$0xf]
        %v2691 = vld [vmem:[%s7 + $0x20] sm:$0xf]
        %v2692 = vld [vmem:[%s7 + $0x24] sm:$0xf]
        %v2693 = vld [vmem:[%s7 + $0x28] sm:$0xf]
        %v2694 = vld [vmem:[%s7 + $0x2c] sm:$0xf]
        %v2695 = vld [vmem:[%s7 + $0x30] sm:$0xf]
        %v2696 = vld [vmem:[%s7 + $0x34] sm:$0xf]
        %v2697 = vld [vmem:[%s7 + $0x38] sm:$0xf]
        %v2698 = vld [vmem:[%s7 + $0x3c] sm:$0xf]
        %v2699 = vld [vmem:[%s7 + $0x40] sm:$0xf]
        %v2700 = vld [vmem:[%s7 + $0x44] sm:$0xf]
        %v2701 = vld [vmem:[%s7 + $0x48] sm:$0xf]
        %v2702 = vld [vmem:[%s7 + $0x4c] sm:$0xf]
        %v2703 = vld [vmem:[%s7 + $0x50] sm:$0xf]
        %v2704 = vld [vmem:[%s7 + $0x54] sm:$0xf]
        %v2705 = vld [vmem:[%s7 + $0x58] sm:$0xf]
        %v2706 = vld [vmem:[%s7 + $0x5c] sm:$0xf]
        %v2707 = vld [vmem:[%s7 + $0x60] sm:$0xf]
        %v2708 = vld [vmem:[%s7 + $0x64] sm:$0xf]
        %v2709 = vld [vmem:[%s7 + $0x68] sm:$0xf]
        %v2710 = vld [vmem:[%s7 + $0x6c] sm:$0xf]
        %v2711 = vld [vmem:[%s7 + $0x70] sm:$0xf]
        %v2712 = vld [vmem:[%s7 + $0x74] sm:$0xf]
        %v2713 = vld [vmem:[%s7 + $0x78] sm:$0xf]
        %v2714 = vld [vmem:[%s7 + $0x7c] sm:$0xf]
        %v2715 = vld [vmem:[%s7 + $0x80] sm:$0xf]
        %v2716 = vld [vmem:[%s7 + $0x84] sm:$0xf]
        %v2717 = vld [vmem:[%s7 + $0x88] sm:$0xf]
        %v2718 = vld [vmem:[%s7 + $0x8c] sm:$0xf]
        %v2719 = vld [vmem:[%s7 + $0x90] sm:$0xf]
        %v2720 = vld [vmem:[%s7 + $0x94] sm:$0xf]
        %v2721 = vld [vmem:[%s7 + $0x98] sm:$0xf]
        %v2722 = vld [vmem:[%s7 + $0x9c] sm:$0xf]
        %v2723 = vld [vmem:[%s7 + $0xa0] sm:$0xf]
        %v2724 = vld [vmem:[%s7 + $0xa4] sm:$0xf]
        %v2725 = vld [vmem:[%s7 + $0xa8] sm:$0xf]
        %v2726 = vld [vmem:[%s7 + $0xac] sm:$0xf]
        %v2727 = vld [vmem:[%s7 + $0xb0] sm:$0xf]
        %v2728 = vld [vmem:[%s7 + $0xb4] sm:$0xf]
        %v2729 = vld [vmem:[%s7 + $0xb8] sm:$0xf]
        %v2730 = vld [vmem:[%s7 + $0xbc] sm:$0xf]
        %v2731 = vld [vmem:[%s7 + $0xc0] sm:$0xf]
        %v2732 = vld [vmem:[%s7 + $0xc4] sm:$0xf]
        %v2733 = vld [vmem:[%s7 + $0xc8] sm:$0xf]
        %v2734 = vld [vmem:[%s7 + $0xcc] sm:$0xf]
        %v2735 = vld [vmem:[%s7 + $0xd0] sm:$0xf]
        %v2736 = vld [vmem:[%s7 + $0xd4] sm:$0xf]
        %v2737 = vld [vmem:[%s7 + $0xd8] sm:$0xf]
        %v2738 = vld [vmem:[%s7 + $0xdc] sm:$0xf]
        %v2739 = vld [vmem:[%s7 + $0xe0] sm:$0xf]
        %v2740 = vld [vmem:[%s7 + $0xe4] sm:$0xf]
        %v2741 = vld [vmem:[%s7 + $0xe8] sm:$0xf]
        %v2742 = vld [vmem:[%s7 + $0xec] sm:$0xf]
        %v2743 = vld [vmem:[%s7 + $0xf0] sm:$0xf]
        %v2744 = vld [vmem:[%s7 + $0xf4] sm:$0xf]
        %v2745 = vld [vmem:[%s7 + $0xf8] sm:$0xf]
        %v2746 = vld [vmem:[%s7 + $0xfc] sm:$0xf]
        %v2747 = vld [vmem:[%s7 + $0x100] sm:$0xf]
        %v2748 = vld [vmem:[%s7 + $0x104] sm:$0xf]
        %v2749 = vld [vmem:[%s7 + $0x108] sm:$0xf]
        %v2750 = vld [vmem:[%s7 + $0x10c] sm:$0xf]
        %v2751 = vld [vmem:[%s7 + $0x110] sm:$0xf]
        %v2752 = vld [vmem:[%s7 + $0x114] sm:$0xf]
        %v2753 = vld [vmem:[%s7 + $0x118] sm:$0xf]
        %v2754 = vld [vmem:[%s7 + $0x11c] sm:$0xf]
        %v2755 = vld [vmem:[%s7 + $0x120] sm:$0xf]
        %v2756 = vld [vmem:[%s7 + $0x124] sm:$0xf]
        %v2757 = vld [vmem:[%s7 + $0x128] sm:$0xf]
        %v2758 = vld [vmem:[%s7 + $0x12c] sm:$0xf]
        %v2759 = vld [vmem:[%s7 + $0x130] sm:$0xf]
        %v2760 = vld [vmem:[%s7 + $0x134] sm:$0xf]
        %v2761 = vld [vmem:[%s7 + $0x138] sm:$0xf]
        %v2762 = vld [vmem:[%s7 + $0x13c] sm:$0xf]
        %v2763 = vld [vmem:[%s7 + $0x140] sm:$0xf]
        %v2764 = vld [vmem:[%s7 + $0x144] sm:$0xf]
        %v2765 = vld [vmem:[%s7 + $0x148] sm:$0xf]
        %v2766 = vld [vmem:[%s7 + $0x14c] sm:$0xf]
        %v2767 = vld [vmem:[%s7 + $0x150] sm:$0xf]
        %v2768 = vld [vmem:[%s7 + $0x154] sm:$0xf]
        %v2769 = vld [vmem:[%s7 + $0x158] sm:$0xf]
        %v2770 = vld [vmem:[%s7 + $0x15c] sm:$0xf]
        %v2771 = vld [vmem:[%s7 + $0x160] sm:$0xf]
        %v2772 = vld [vmem:[%s7 + $0x164] sm:$0xf]
        %v2773 = vld [vmem:[%s7 + $0x168] sm:$0xf]
        %v2774 = vld [vmem:[%s7 + $0x16c] sm:$0xf]
        %v2775 = vld [vmem:[%s7 + $0x170] sm:$0xf]
        %v2776 = vld [vmem:[%s7 + $0x174] sm:$0xf]
        %v2777 = vld [vmem:[%s7 + $0x178] sm:$0xf]
        %v2778 = vld [vmem:[%s7 + $0x17c] sm:$0xf]
        %v2779 = vld [vmem:[%s7 + $0x180] sm:$0xf]
        %v2780 = vld [vmem:[%s7 + $0x184] sm:$0xf]
        %v2781 = vld [vmem:[%s7 + $0x188] sm:$0xf]
        %v2782 = vld [vmem:[%s7 + $0x18c] sm:$0xf]
        %v2783 = vld [vmem:[%s7 + $0x190] sm:$0xf]
        %v2784 = vld [vmem:[%s7 + $0x194] sm:$0xf]
        %v2785 = vld [vmem:[%s7 + $0x198] sm:$0xf]
        %v2786 = vld [vmem:[%s7 + $0x19c] sm:$0xf]
        %v2787 = vld [vmem:[%s7 + $0x1a0] sm:$0xf]
        %v2788 = vld [vmem:[%s7 + $0x1a4] sm:$0xf]
        %v2789 = vld [vmem:[%s7 + $0x1a8] sm:$0xf]
        %v2790 = vld [vmem:[%s7 + $0x1ac] sm:$0xf]
        %v2791 = vld [vmem:[%s7 + $0x1b0] sm:$0xf]
        %v2792 = vld [vmem:[%s7 + $0x1b4] sm:$0xf]
        %v2793 = vld [vmem:[%s7 + $0x1b8] sm:$0xf]
        %v2794 = vld [vmem:[%s7 + $0x1bc] sm:$0xf]
        %v2795 = vld [vmem:[%s7 + $0x1c0] sm:$0xf]
        %v2796 = vld [vmem:[%s7 + $0x1c4] sm:$0xf]
        %v2797 = vld [vmem:[%s7 + $0x1c8] sm:$0xf]
        %v2798 = vld [vmem:[%s7 + $0x1cc] sm:$0xf]
        %v2799 = vld [vmem:[%s7 + $0x1d0] sm:$0xf]
        %v2800 = vld [vmem:[%s7 + $0x1d4] sm:$0xf]
        %v2801 = vld [vmem:[%s7 + $0x1d8] sm:$0xf]
        %v2802 = vld [vmem:[%s7 + $0x1dc] sm:$0xf]
        %v2803 = vld [vmem:[%s7 + $0x1e0] sm:$0xf]
        %v2804 = vld [vmem:[%s7 + $0x1e4] sm:$0xf]
        %v2805 = vld [vmem:[%s7 + $0x1e8] sm:$0xf]
        %v2806 = vld [vmem:[%s7 + $0x1ec] sm:$0xf]
        %v2807 = vld [vmem:[%s7 + $0x1f0] sm:$0xf]
        %v2808 = vld [vmem:[%s7 + $0x1f4] sm:$0xf]
        %v2809 = vld [vmem:[%s7 + $0x1f8] sm:$0xf]
        %v2810 = vld [vmem:[%s7 + $0x1fc] sm:$0xf]
        %v2811 = vld [vmem:[%s8] sm:$0x1]
        %v2940 = vunpack.c.l.b16 %v2683
        %v2941 = vunpack.c.l.b16 %v2684
        %v2942 = vunpack.c.l.b16 %v2685
        %v2943 = vunpack.c.l.b16 %v2686
        %v2944 = vunpack.c.l.b16 %v2687
        %v2945 = vunpack.c.l.b16 %v2688
        %v2946 = vunpack.c.l.b16 %v2689
        %v2947 = vunpack.c.l.b16 %v2690
        %v2948 = vunpack.c.l.b16 %v2691
        %v2949 = vunpack.c.l.b16 %v2692
        %v2950 = vunpack.c.l.b16 %v2693
        %v2951 = vunpack.c.l.b16 %v2694
        %v2952 = vunpack.c.l.b16 %v2695
        %v2953 = vunpack.c.l.b16 %v2696
        %v2954 = vunpack.c.l.b16 %v2697
        %v2955 = vunpack.c.l.b16 %v2698
        %v2956 = vunpack.c.l.b16 %v2699
        %v2957 = vunpack.c.l.b16 %v2700
        %v2958 = vunpack.c.l.b16 %v2701
        %v2959 = vunpack.c.l.b16 %v2702
        %v2960 = vunpack.c.l.b16 %v2703
        %v2961 = vunpack.c.l.b16 %v2704
        %v2962 = vunpack.c.l.b16 %v2705
        %v2963 = vunpack.c.l.b16 %v2706
        %v2964 = vunpack.c.l.b16 %v2707
        %v2965 = vunpack.c.l.b16 %v2708
        %v2966 = vunpack.c.l.b16 %v2709
        %v2967 = vunpack.c.l.b16 %v2710
        %v2968 = vunpack.c.l.b16 %v2711
        %v2969 = vunpack.c.l.b16 %v2712
        %v2970 = vunpack.c.l.b16 %v2713
        %v2971 = vunpack.c.l.b16 %v2714
        %v2972 = vunpack.c.l.b16 %v2715
        %v2973 = vunpack.c.l.b16 %v2716
        %v2974 = vunpack.c.l.b16 %v2717
        %v2975 = vunpack.c.l.b16 %v2718
        %v2976 = vunpack.c.l.b16 %v2719
        %v2977 = vunpack.c.l.b16 %v2720
        %v2978 = vunpack.c.l.b16 %v2721
        %v2979 = vunpack.c.l.b16 %v2722
        %v2980 = vunpack.c.l.b16 %v2723
        %v2981 = vunpack.c.l.b16 %v2724
        %v2982 = vunpack.c.l.b16 %v2725
        %v2983 = vunpack.c.l.b16 %v2726
        %v2984 = vunpack.c.l.b16 %v2727
        %v2985 = vunpack.c.l.b16 %v2728
        %v2986 = vunpack.c.l.b16 %v2729
        %v2987 = vunpack.c.l.b16 %v2730
        %v2988 = vunpack.c.l.b16 %v2731
        %v2989 = vunpack.c.l.b16 %v2732
        %v2990 = vunpack.c.l.b16 %v2733
        %v2991 = vunpack.c.l.b16 %v2734
        %v2992 = vunpack.c.l.b16 %v2735
        %v2993 = vunpack.c.l.b16 %v2736
        %v2994 = vunpack.c.l.b16 %v2737
        %v2995 = vunpack.c.l.b16 %v2738
        %v2996 = vunpack.c.l.b16 %v2739
        %v2997 = vunpack.c.l.b16 %v2740
        %v2998 = vunpack.c.l.b16 %v2741
        %v2999 = vunpack.c.l.b16 %v2742
        %v3000 = vunpack.c.l.b16 %v2743
        %v3001 = vunpack.c.l.b16 %v2744
        %v3002 = vunpack.c.l.b16 %v2745
        %v3003 = vunpack.c.l.b16 %v2746
        %v3004 = vunpack.c.l.b16 %v2747
        %v3005 = vunpack.c.l.b16 %v2748
        %v3006 = vunpack.c.l.b16 %v2749
        %v3007 = vunpack.c.l.b16 %v2750
        %v3008 = vunpack.c.l.b16 %v2751
        %v3009 = vunpack.c.l.b16 %v2752
        %v3010 = vunpack.c.l.b16 %v2753
        %v3011 = vunpack.c.l.b16 %v2754
        %v3012 = vunpack.c.l.b16 %v2755
        %v3013 = vunpack.c.l.b16 %v2756
        %v3014 = vunpack.c.l.b16 %v2757
        %v3015 = vunpack.c.l.b16 %v2758
        %v3016 = vunpack.c.l.b16 %v2759
        %v3017 = vunpack.c.l.b16 %v2760
        %v3018 = vunpack.c.l.b16 %v2761
        %v3019 = vunpack.c.l.b16 %v2762
        %v3020 = vunpack.c.l.b16 %v2763
        %v3021 = vunpack.c.l.b16 %v2764
        %v3022 = vunpack.c.l.b16 %v2765
        %v3023 = vunpack.c.l.b16 %v2766
        %v3024 = vunpack.c.l.b16 %v2767
        %v3025 = vunpack.c.l.b16 %v2768
        %v3026 = vunpack.c.l.b16 %v2769
        %v3027 = vunpack.c.l.b16 %v2770
        %v3028 = vunpack.c.l.b16 %v2771
        %v3029 = vunpack.c.l.b16 %v2772
        %v3030 = vunpack.c.l.b16 %v2773
        %v3031 = vunpack.c.l.b16 %v2774
        %v3032 = vunpack.c.l.b16 %v2775
        %v3033 = vunpack.c.l.b16 %v2776
        %v3034 = vunpack.c.l.b16 %v2777
        %v3035 = vunpack.c.l.b16 %v2778
        %v3036 = vunpack.c.l.b16 %v2779
        %v3037 = vunpack.c.l.b16 %v2780
        %v3038 = vunpack.c.l.b16 %v2781
        %v3039 = vunpack.c.l.b16 %v2782
        %v3040 = vunpack.c.l.b16 %v2783
        %v3041 = vunpack.c.l.b16 %v2784
        %v3042 = vunpack.c.l.b16 %v2785
        %v3043 = vunpack.c.l.b16 %v2786
        %v3044 = vunpack.c.l.b16 %v2787
        %v3045 = vunpack.c.l.b16 %v2788
        %v3046 = vunpack.c.l.b16 %v2789
        %v3047 = vunpack.c.l.b16 %v2790
        %v3048 = vunpack.c.l.b16 %v2791
        %v3049 = vunpack.c.l.b16 %v2792
        %v3050 = vunpack.c.l.b16 %v2793
        %v3051 = vunpack.c.l.b16 %v2794
        %v3052 = vunpack.c.l.b16 %v2795
        %v3053 = vunpack.c.l.b16 %v2796
        %v3054 = vunpack.c.l.b16 %v2797
        %v3055 = vunpack.c.l.b16 %v2798
        %v3056 = vunpack.c.l.b16 %v2799
        %v3057 = vunpack.c.l.b16 %v2800
        %v3058 = vunpack.c.l.b16 %v2801
        %v3059 = vunpack.c.l.b16 %v2802
        %v3060 = vunpack.c.l.b16 %v2803
        %v3061 = vunpack.c.l.b16 %v2804
        %v3062 = vunpack.c.l.b16 %v2805
        %v3063 = vunpack.c.l.b16 %v2806
        %v3064 = vunpack.c.l.b16 %v2807
        %v3065 = vunpack.c.l.b16 %v2808
        %v3066 = vunpack.c.l.b16 %v2809
        %v3067 = vunpack.c.l.b16 %v2810
        %v3068 = vpack.c.b16 %v2941, %v2940
        %v3069 = vpack.c.b16 %v2943, %v2942
        %v3070 = vpack.c.b16 %v2945, %v2944
        %v3071 = vpack.c.b16 %v2947, %v2946
        %v3072 = vpack.c.b16 %v2949, %v2948
        %v3073 = vpack.c.b16 %v2951, %v2950
        %v3074 = vpack.c.b16 %v2953, %v2952
        %v3075 = vpack.c.b16 %v2955, %v2954
        %v3076 = vpack.c.b16 %v2957, %v2956
        %v3077 = vpack.c.b16 %v2959, %v2958
        %v3078 = vpack.c.b16 %v2961, %v2960
        %v3079 = vpack.c.b16 %v2963, %v2962
        %v3080 = vpack.c.b16 %v2965, %v2964
        %v3081 = vpack.c.b16 %v2967, %v2966
        %v3082 = vpack.c.b16 %v2969, %v2968
        %v3083 = vpack.c.b16 %v2971, %v2970
        %v3084 = vpack.c.b16 %v2973, %v2972
        %v3085 = vpack.c.b16 %v2975, %v2974
        %v3086 = vpack.c.b16 %v2977, %v2976
        %v3087 = vpack.c.b16 %v2979, %v2978
        %v3088 = vpack.c.b16 %v2981, %v2980
        %v3089 = vpack.c.b16 %v2983, %v2982
        %v3090 = vpack.c.b16 %v2985, %v2984
        %v3091 = vpack.c.b16 %v2987, %v2986
        %v3092 = vpack.c.b16 %v2989, %v2988
        %v3093 = vpack.c.b16 %v2991, %v2990
        %v3094 = vpack.c.b16 %v2993, %v2992
        %v3095 = vpack.c.b16 %v2995, %v2994
        %v3096 = vpack.c.b16 %v2997, %v2996
        %v3097 = vpack.c.b16 %v2999, %v2998
        %v3098 = vpack.c.b16 %v3001, %v3000
        %v3099 = vpack.c.b16 %v3003, %v3002
        %v3100 = vpack.c.b16 %v3005, %v3004
        %v3101 = vpack.c.b16 %v3007, %v3006
        %v3102 = vpack.c.b16 %v3009, %v3008
        %v3103 = vpack.c.b16 %v3011, %v3010
        %v3104 = vpack.c.b16 %v3013, %v3012
        %v3105 = vpack.c.b16 %v3015, %v3014
        %v3106 = vpack.c.b16 %v3017, %v3016
        %v3107 = vpack.c.b16 %v3019, %v3018
        %v3108 = vpack.c.b16 %v3021, %v3020
        %v3109 = vpack.c.b16 %v3023, %v3022
        %v3110 = vpack.c.b16 %v3025, %v3024
        %v3111 = vpack.c.b16 %v3027, %v3026
        %v3112 = vpack.c.b16 %v3029, %v3028
        %v3113 = vpack.c.b16 %v3031, %v3030
        %v3114 = vpack.c.b16 %v3033, %v3032
        %v3115 = vpack.c.b16 %v3035, %v3034
        %v3116 = vpack.c.b16 %v3037, %v3036
        %v3117 = vpack.c.b16 %v3039, %v3038
        %v3118 = vpack.c.b16 %v3041, %v3040
        %v3119 = vpack.c.b16 %v3043, %v3042
        %v3120 = vpack.c.b16 %v3045, %v3044
        %v3121 = vpack.c.b16 %v3047, %v3046
        %v3122 = vpack.c.b16 %v3049, %v3048
        %v3123 = vpack.c.b16 %v3051, %v3050
        %v3124 = vpack.c.b16 %v3053, %v3052
        %v3125 = vpack.c.b16 %v3055, %v3054
        %v3126 = vpack.c.b16 %v3057, %v3056
        %v3127 = vpack.c.b16 %v3059, %v3058
        %v3128 = vpack.c.b16 %v3061, %v3060
        %v3129 = vpack.c.b16 %v3063, %v3062
        %v3130 = vpack.c.b16 %v3065, %v3064
        %v3131 = vpack.c.b16 %v3067, %v3066
        %3196 = vmatprep.subr.bf16.mxu0 0
        %3197 = vmatpush1.bf16.msra.mxu0 %v3068
        %3198 = vmatprep.subr.bf16.mxu0 0
        %3199 = vmatpush1.bf16.msra.mxu0 %v3069
        %3200 = vmatprep.subr.bf16.mxu0 0
        %3201 = vmatpush1.bf16.msra.mxu0 %v3070
        %3202 = vmatprep.subr.bf16.mxu0 0
        %3203 = vmatpush1.bf16.msra.mxu0 %v3071
        %3204 = vmatprep.subr.bf16.mxu0 0
        %3205 = vmatpush1.bf16.msra.mxu0 %v3072
        %3206 = vmatprep.subr.bf16.mxu0 0
        %3207 = vmatpush1.bf16.msra.mxu0 %v3073
        %3208 = vmatprep.subr.bf16.mxu0 0
        %3209 = vmatpush1.bf16.msra.mxu0 %v3074
        %3210 = vmatprep.subr.bf16.mxu0 0
        %3211 = vmatpush1.bf16.msra.mxu0 %v3075
        %3212 = vmatprep.subr.bf16.mxu0 0
        %3213 = vmatpush1.bf16.msra.mxu0 %v3076
        %3214 = vmatprep.subr.bf16.mxu0 0
        %3215 = vmatpush1.bf16.msra.mxu0 %v3077
        %3216 = vmatprep.subr.bf16.mxu0 0
        %3217 = vmatpush1.bf16.msra.mxu0 %v3078
        %3218 = vmatprep.subr.bf16.mxu0 0
        %3219 = vmatpush1.bf16.msra.mxu0 %v3079
        %3220 = vmatprep.subr.bf16.mxu0 0
        %3221 = vmatpush1.bf16.msra.mxu0 %v3080
        %3222 = vmatprep.subr.bf16.mxu0 0
        %3223 = vmatpush1.bf16.msra.mxu0 %v3081
        %3224 = vmatprep.subr.bf16.mxu0 0
        %3225 = vmatpush1.bf16.msra.mxu0 %v3082
        %3226 = vmatprep.subr.bf16.mxu0 0
        %3227 = vmatpush1.bf16.msra.mxu0 %v3083
        %3228 = vmatprep.mubr.bf16.mxu0 %v2676
        %3229 = vmatmul.mubr.bf16.gmra.mrb[0].mxu0 %v2675
        %v3230 = vpop.f32.mrb[0].mxu0
        %v3231 = vadd.f32 %v2811, %v3230
        %v3232 = vpop.f32.mrb[0].mxu0
        %v3233 = vpop.f32.mrb[0].mxu0
        %v3234 = vpop.f32.mrb[0].mxu0
        %3235 = vdwg.mxu0
        %3236 = vmatprep.subr.bf16.mxu0 0
        %3237 = vmatpush1.bf16.msra.mxu0 %v3084
        %3238 = vmatprep.subr.bf16.mxu0 0
        %3239 = vmatpush1.bf16.msra.mxu0 %v3085
        %3240 = vmatprep.subr.bf16.mxu0 0
        %3241 = vmatpush1.bf16.msra.mxu0 %v3086
        %3242 = vmatprep.subr.bf16.mxu0 0
        %3243 = vmatpush1.bf16.msra.mxu0 %v3087
        %3244 = vmatprep.subr.bf16.mxu0 0
        %3245 = vmatpush1.bf16.msra.mxu0 %v3088
        %3246 = vmatprep.subr.bf16.mxu0 0
        %3247 = vmatpush1.bf16.msra.mxu0 %v3089
        %3248 = vmatprep.subr.bf16.mxu0 0
        %3249 = vmatpush1.bf16.msra.mxu0 %v3090
        %3250 = vmatprep.subr.bf16.mxu0 0
        %3251 = vmatpush1.bf16.msra.mxu0 %v3091
        %3252 = vmatprep.subr.bf16.mxu0 0
        %3253 = vmatpush1.bf16.msra.mxu0 %v3092
        %3254 = vmatprep.subr.bf16.mxu0 0
        %3255 = vmatpush1.bf16.msra.mxu0 %v3093
        %3256 = vmatprep.subr.bf16.mxu0 0
        %3257 = vmatpush1.bf16.msra.mxu0 %v3094
        %3258 = vmatprep.subr.bf16.mxu0 0
        %3259 = vmatpush1.bf16.msra.mxu0 %v3095
        %3260 = vmatprep.subr.bf16.mxu0 0
        %3261 = vmatpush1.bf16.msra.mxu0 %v3096
        %3262 = vmatprep.subr.bf16.mxu0 0
        %3263 = vmatpush1.bf16.msra.mxu0 %v3097
        %3264 = vmatprep.subr.bf16.mxu0 0
        %3265 = vmatpush1.bf16.msra.mxu0 %v3098
        %3266 = vmatprep.subr.bf16.mxu0 0
        %3267 = vmatpush1.bf16.msra.mxu0 %v3099
        %3268 = vmatprep.mubr.bf16.mxu0 %v2678
        %3269 = vmatmul.mubr.bf16.gmra.mrb[0].mxu0 %v2677
        %v3270 = vpop.f32.mrb[0].mxu0
        %v3271 = vadd.f32 %v3231, %v3270
        %v3272 = vpop.f32.mrb[0].mxu0
        %v3273 = vpop.f32.mrb[0].mxu0
        %v3274 = vpop.f32.mrb[0].mxu0
        %3275 = vdwg.mxu0
        %3276 = vmatprep.subr.bf16.mxu0 0
        %3277 = vmatpush1.bf16.msra.mxu0 %v3100
        %3278 = vmatprep.subr.bf16.mxu0 0
        %3279 = vmatpush1.bf16.msra.mxu0 %v3101
        %3280 = vmatprep.subr.bf16.mxu0 0
        %3281 = vmatpush1.bf16.msra.mxu0 %v3102
        %3282 = vmatprep.subr.bf16.mxu0 0
        %3283 = vmatpush1.bf16.msra.mxu0 %v3103
        %3284 = vmatprep.subr.bf16.mxu0 0
        %3285 = vmatpush1.bf16.msra.mxu0 %v3104
        %3286 = vmatprep.subr.bf16.mxu0 0
        %3287 = vmatpush1.bf16.msra.mxu0 %v3105
        %3288 = vmatprep.subr.bf16.mxu0 0
        %3289 = vmatpush1.bf16.msra.mxu0 %v3106
        %3290 = vmatprep.subr.bf16.mxu0 0
        %3291 = vmatpush1.bf16.msra.mxu0 %v3107
        %3292 = vmatprep.subr.bf16.mxu0 0
        %3293 = vmatpush1.bf16.msra.mxu0 %v3108
        %3294 = vmatprep.subr.bf16.mxu0 0
        %3295 = vmatpush1.bf16.msra.mxu0 %v3109
        %3296 = vmatprep.subr.bf16.mxu0 0
        %3297 = vmatpush1.bf16.msra.mxu0 %v3110
        %3298 = vmatprep.subr.bf16.mxu0 0
        %3299 = vmatpush1.bf16.msra.mxu0 %v3111
        %3300 = vmatprep.subr.bf16.mxu0 0
        %3301 = vmatpush1.bf16.msra.mxu0 %v3112
        %3302 = vmatprep.subr.bf16.mxu0 0
        %3303 = vmatpush1.bf16.msra.mxu0 %v3113
        %3304 = vmatprep.subr.bf16.mxu0 0
        %3305 = vmatpush1.bf16.msra.mxu0 %v3114
        %3306 = vmatprep.subr.bf16.mxu0 0
        %3307 = vmatpush1.bf16.msra.mxu0 %v3115
        %3308 = vmatprep.mubr.bf16.mxu0 %v2680
        %3309 = vmatmul.mubr.bf16.gmra.mrb[0].mxu0 %v2679
        %v3310 = vpop.f32.mrb[0].mxu0
        %v3311 = vadd.f32 %v3271, %v3310
        %v3312 = vpop.f32.mrb[0].mxu0
        %v3313 = vpop.f32.mrb[0].mxu0
        %v3314 = vpop.f32.mrb[0].mxu0
        %3315 = vdwg.mxu0
        %3316 = vmatprep.subr.bf16.mxu0 0
        %3317 = vmatpush1.bf16.msra.mxu0 %v3116
        %3318 = vmatprep.subr.bf16.mxu0 0
        %3319 = vmatpush1.bf16.msra.mxu0 %v3117
        %3320 = vmatprep.subr.bf16.mxu0 0
        %3321 = vmatpush1.bf16.msra.mxu0 %v3118
        %3322 = vmatprep.subr.bf16.mxu0 0
        %3323 = vmatpush1.bf16.msra.mxu0 %v3119
        %3324 = vmatprep.subr.bf16.mxu0 0
        %3325 = vmatpush1.bf16.msra.mxu0 %v3120
        %3326 = vmatprep.subr.bf16.mxu0 0
        %3327 = vmatpush1.bf16.msra.mxu0 %v3121
        %3328 = vmatprep.subr.bf16.mxu0 0
        %3329 = vmatpush1.bf16.msra.mxu0 %v3122
        %3330 = vmatprep.subr.bf16.mxu0 0
        %3331 = vmatpush1.bf16.msra.mxu0 %v3123
        %3332 = vmatprep.subr.bf16.mxu0 0
        %3333 = vmatpush1.bf16.msra.mxu0 %v3124
        %3334 = vmatprep.subr.bf16.mxu0 0
        %3335 = vmatpush1.bf16.msra.mxu0 %v3125
        %3336 = vmatprep.subr.bf16.mxu0 0
        %3337 = vmatpush1.bf16.msra.mxu0 %v3126
        %3338 = vmatprep.subr.bf16.mxu0 0
        %3339 = vmatpush1.bf16.msra.mxu0 %v3127
        %3340 = vmatprep.subr.bf16.mxu0 0
        %3341 = vmatpush1.bf16.msra.mxu0 %v3128
        %3342 = vmatprep.subr.bf16.mxu0 0
        %3343 = vmatpush1.bf16.msra.mxu0 %v3129
        %3344 = vmatprep.subr.bf16.mxu0 0
        %3345 = vmatpush1.bf16.msra.mxu0 %v3130
        %3346 = vmatprep.subr.bf16.mxu0 0
        %3347 = vmatpush1.bf16.msra.mxu0 %v3131
        %3348 = vmatprep.mubr.bf16.mxu0 %v2682
        %3349 = vmatmul.mubr.bf16.gmra.mrb[0].mxu0 %v2681
        %v3350 = vpop.f32.mrb[0].mxu0
        %v3351 = vadd.f32 %v3311, %v3350
        %v3352 = vpop.f32.mrb[0].mxu0
        %v3353 = vpop.f32.mrb[0].mxu0
        %v3354 = vpop.f32.mrb[0].mxu0
        %3355 = vdwg.mxu0
        %3356 = vst [vmem:[%s324] sm:$0x1] %v3351
        %s3357 = sand.u32 %s225, 1
        %s3358 = scalar_lea.sflag [#allocation3], %s3357
        %s3359 = sand.u32 %s225, 1
        %s3360 = scalar_lea.vmem [#allocation2], %s3359
        // Predicated region
        $region57: #{flower_classifier_forward.1} parent=55 // pred_check
          %p3361 = pneg %p235
        $region58: #{flower_classifier_forward.1} parent=55 // pred_check_branch
          %3363 = sbr.rel (%p3361) target = $region60
        $region59: #{flower_classifier_forward.1} parent=55 // pred_region
          %s3365 = ssub.s32 16, 16
          %3366 = vsyncadd %s3358, %s3365
          %s3367 = smul.addr %s23, 16
          %s3368 = scalar_lea.hbm %s9, %s3367
          %s3370 = sshll.u32 %s3360, 4
          %s3371 = int_to_ptr.vmem [resolvable:$true] %s3370
          %3373 = dma.vmem_to_hbm [thread:$0]  %s3371, 16, %s3368, %s3358
        $region60: #{flower_classifier_forward.1} parent=55 // pred_fallthru
          _
      $region56: #{flower_classifier_forward.1} parent=5 // pred_fallthru
        _
      %p3374 = scmp.le.s32.totalorder 2, %s18
      // Predicated region
      $region61: #{flower_classifier_forward.1} parent=5 // pred_check
        %p3375 = pneg %p3374
      $region62: #{flower_classifier_forward.1} parent=5 // pred_check_branch
        %3377 = sbr.rel (%p3375) target = $region64
      $region63: #{flower_classifier_forward.1} parent=5 // pred_region
        %s3378 = ssub.s32 %s18, 2
        // Predicated region
        $region65: #{flower_classifier_forward.1} parent=63 // pred_check
          %p3379 = pneg %p241
        $region66: #{flower_classifier_forward.1} parent=63 // pred_check_branch
          %3381 = sbr.rel (%p3379) target = $region68
        $region67: #{flower_classifier_forward.1} parent=63 // pred_region
          %s3382 = sand.u32 %s226, 1
          %s3383 = scalar_lea.sflag [#allocation3], %s3382
          %s3384 = sand.u32 %s226, 1
          %s3385 = scalar_lea.vmem [#allocation2], %s3384
          %3386 = dma.done %s3383, 16
        $region68: #{flower_classifier_forward.1} parent=63 // pred_fallthru
          _
      $region64: #{flower_classifier_forward.1} parent=5 // pred_fallthru
        _
    $region6: #{flower_classifier_forward.1} parent=1 // loop_footer
      %s22 = sadd.s32 1, %s18
    $region7: #{flower_classifier_forward.1} parent=1 // loop_footer_branch
      %17 = sbr.rel target = $region3
    $region8: #{flower_classifier_forward.1} parent=1 // loop_exit
      _
    %3387 = vsyncpa [#allocation3], 1
    %s3388 = scalar_lea.sflag [#allocation3], 1
    %3389 = vsyncpa %s3388, 1

</llo_original>
